<compile_context>
chip_gen: v7x
topology: tpu7x:2x2x1
jax: 0.10.0
libtpu: 0.0.40
codegen_flags: <defaults>
</compile_context>

<pallas_src>
import functools

import jax
import jax.numpy as jnp
import numpy as np
from jax.experimental import pallas as pl
from jax.experimental.pallas import tpu as pltpu


def _round_up(x, m):
    return (x + m - 1) // m * m


def _conv3d_taps_kernel(x_ref, w_ref, b_ref, o_ref, *, kd_sz, kh_sz, h_out):
    """One (batch, output pitch-plane) step: KD*KH accumulating MXU matmuls."""
    # x_ref: (D_pad, H_p, W16, KWC_PAD)  bf16, one batch element (kw taps in lanes)
    # w_ref: (KD*KH, KWC_PAD, COUT_PAD)  bf16, rows ordered (kw, ci)
    # b_ref: (1, COUT_PAD)               f32
    # o_ref: (M_hw, COUT_PAD)            bf16, M_hw = h_out * W16 (lane-dense)
    d = pl.program_id(1)
    w16 = x_ref.shape[2]
    kwc = x_ref.shape[3]
    m_hw = h_out * w16

    # f32 register accumulator (no im2col scratch, no store/reload round-trip).
    acc = jnp.zeros((m_hw, o_ref.shape[1]), jnp.float32)

    # KD*KH = 9 static taps; Python unroll is fine at this size.
    # (Switch to lax.fori_loop(..., unroll=True) if the tap count grows.)
    for kd in range(kd_sz):
        for kh in range(kh_sz):
            # Aligned slab view: kd via a dynamic offset on the leading dim,
            # kh via a static offset on the (untiled) H axis.  The trailing
            # (W16, KWC_PAD) block is untouched and W16 is a multiple of 16, so
            # flattening into matmul rows stays relayout-free for bf16.
            slab = x_ref[pl.ds(d + kd, 1), kh:kh + h_out, :, :]
            lhs = slab.reshape(m_hw, kwc)
            # bf16 x bf16 -> f32 accumulate on the MXU.  (We deliberately feed
            # bf16; tolerance vs the fp32 reference is widened accordingly.)
            acc = acc + jnp.dot(lhs, w_ref[kd * kh_sz + kh],
                                preferred_element_type=jnp.float32)

    o_ref[...] = (acc + b_ref[...]).astype(o_ref.dtype)


def wraparound_conv3d(x_ncdhw, weight_oidhw, bias, *, stride=1, padding=0,
                      use_wraparound=False):
    """Forward pass of WraparoundConv3D.

    x_ncdhw:      (N, Cin, D, H, W)
    weight_oidhw: (Cout, Cin, KD, KH, KW)
    bias:         (Cout,)
    returns:      (N, Cout, D_out, H_out, W_out)
    """
    assert stride == 1  # TODO(synk): general stride not implemented (module default stride=1)

    out_dtype = x_ncdhw.dtype
    Cout, Cin, KD, KH, KW = weight_oidhw.shape

    if use_wraparound:
        # Wraparound padding on the pitch (D) axis, as in the PyTorch module.
        pad_front = x_ncdhw[:, :, -1:, :, :]
        pad_back = x_ncdhw[:, :, :1, :, :]
        x_ncdhw = jnp.concatenate([pad_front, x_ncdhw, pad_back], axis=2)
    if padding:
        # nn.Conv3d zero-pads all three spatial dims of its (already wrapped)
        # input -- matches the PyTorch module exactly.
        p = int(padding)
        x_ncdhw = jnp.pad(x_ncdhw, ((0, 0), (0, 0), (p, p), (p, p), (p, p)))

    # NDHWC, bf16 feed to the MXU (f32 accumulation in-kernel).
    x = jnp.transpose(x_ncdhw, (0, 2, 3, 4, 1)).astype(jnp.bfloat16)
    N, D_pad, H_p, W_p, _ = x.shape
    D_out = D_pad - KD + 1
    H_out = H_p - KH + 1
    W_out = W_p - KW + 1

    # ---- wrapper-side layout plumbing (XLA, essentially free) ---------------
    # Pad W up to a multiple of 16 (bf16 sublane packing) so in-kernel flattens
    # stay aligned.
    W16 = _round_up(W_p, 16)
    if W16 != W_p:
        x = jnp.pad(x, ((0, 0), (0, 0), (0, 0), (0, W16 - W_p), (0, 0)))

    # Unfold ONLY the kw taps into the lane dim (KW copies; kd/kh are handled
    # in-kernel).  Rolled-in wrap values only land in columns w >= W_out, which
    # are sliced away below.
    x_kw = jnp.concatenate(
        [jnp.roll(x, -kw, axis=3) for kw in range(KW)], axis=-1)
    KWC = KW * Cin
    KWC_PAD = _round_up(KWC, 16)
    if KWC_PAD != KWC:
        x_kw = jnp.pad(x_kw,
                       ((0, 0), (0, 0), (0, 0), (0, 0), (0, KWC_PAD - KWC)))

    COUT_PAD = _round_up(Cout, 128)
    M_hw = H_out * W16

    # Weight -> (KD*KH, KW*Cin, Cout): rows ordered (kw, ci) to match the lane
    # order of x_kw; bf16 + zero padded.
    w_r = jnp.transpose(weight_oidhw, (2, 3, 4, 1, 0)).reshape(KD * KH, KWC, Cout)
    w_pad = jnp.zeros((KD * KH, KWC_PAD, COUT_PAD), jnp.bfloat16)
    w_pad = w_pad.at[:, :KWC, :Cout].set(w_r.astype(jnp.bfloat16))
    b_pad = jnp.zeros((1, COUT_PAD), jnp.float32).at[0, :Cout].set(
        bias.astype(jnp.float32))

    kernel = functools.partial(_conv3d_taps_kernel, kd_sz=KD, kh_sz=KH,
                               h_out=H_out)

    flops = int(2 * N * D_out * H_out * W_out * Cout * KD * KH * KW * Cin)
    bytes_accessed = int(2 * x_kw.size + 2 * w_pad.size + 4 * b_pad.size
                         + 2 * N * D_out * M_hw * COUT_PAD)

    out_fat = pl.pallas_call(
        kernel,
        out_shape=jax.ShapeDtypeStruct((N, D_out, M_hw, COUT_PAD), jnp.bfloat16),
        grid=(N, D_out),
        in_specs=[
            # Full (wraparound-padded) volume of one batch element; index_map is
            # constant along the d grid axis so the block is reused across the
            # D_out steps of a given batch element.
            pl.BlockSpec((None, D_pad, H_p, W16, KWC_PAD),
                         lambda n, d: (n, 0, 0, 0, 0)),
            # Weight / bias: constant index_maps -> fetched once, stay resident.
            pl.BlockSpec((KD * KH, KWC_PAD, COUT_PAD), lambda n, d: (0, 0, 0)),
            pl.BlockSpec((1, COUT_PAD), lambda n, d: (0, 0)),
        ],
        out_specs=pl.BlockSpec((None, None, M_hw, COUT_PAD),
                               lambda n, d: (n, d, 0, 0)),
        compiler_params=pltpu.CompilerParams(
            dimension_semantics=("parallel", "parallel")),
        cost_estimate=pl.CostEstimate(
            flops=flops, transcendentals=0, bytes_accessed=bytes_accessed),
    )(x_kw, w_pad, b_pad)

    # Undo the lane-dense "fat" layout: slice the valid region, back to NCDHW.
    out = out_fat.reshape(N, D_out, H_out, W16, COUT_PAD)[:, :, :, :W_out, :Cout]
    return jnp.transpose(out, (0, 4, 1, 2, 3)).astype(out_dtype)


if __name__ == "__main__":
    key = jax.random.PRNGKey(0)
    kx, kw, kb = jax.random.split(key, 3)

    # Module config: in_channels=4, out_channels=8, kernel_size=3,
    # stride=1, padding=0, use_wraparound=True
    N, Cin, D, H, W = 2, 4, 8, 8, 8
    Cout, K = 8, 3

    x = jax.random.normal(kx, (N, Cin, D, H, W), jnp.float32)

    # kaiming_normal_(mode='fan_out', nonlinearity='relu'):
    # std = sqrt(2 / fan_out), fan_out = Cout * K^3
    fan_out = Cout * K * K * K
    weight = jax.random.normal(kw, (Cout, Cin, K, K, K), jnp.float32) * np.sqrt(
        2.0 / fan_out)
    # Conv3d default bias init: U(-1/sqrt(fan_in), 1/sqrt(fan_in))
    fan_in = Cin * K * K * K
    bound = 1.0 / np.sqrt(fan_in)
    bias = jax.random.uniform(kb, (Cout,), jnp.float32, -bound, bound)

    out = wraparound_conv3d(x, weight, bias, stride=1, padding=0,
                            use_wraparound=True)
    out = jax.block_until_ready(out)

    # Reference (plain JAX, fp32) to validate semantics.  The kernel feeds the
    # MXU bf16 (f32 accumulation), so tolerances are widened vs the fp32 conv.
    xw = jnp.concatenate([x[:, :, -1:], x, x[:, :, :1]], axis=2)
    ref = jax.lax.conv_general_dilated(
        jnp.transpose(xw, (0, 2, 3, 4, 1)),
        jnp.transpose(weight, (2, 3, 4, 1, 0)),
        window_strides=(1, 1, 1), padding="VALID",
        dimension_numbers=("NDHWC", "DHWIO", "NDHWC"),
        precision=jax.lax.Precision.HIGHEST,
    ) + bias[None, None, None, None, :]
    ref = jnp.transpose(ref, (0, 4, 1, 2, 3))

    assert out.shape == (N, Cout, D, H - K + 1, W - K + 1), out.shape
    np.testing.assert_allclose(np.asarray(out), np.asarray(ref),
                               rtol=2e-2, atol=2e-2)
    print("KERNEL_OK")
</pallas_src>

<mosaic_0001>
module attributes {stable_mosaic.version = 11 : i64} {
  func.func @_conv3d_taps_kernel(%arg0: i32, %arg1: i32, %arg2: memref<1x10x8x16x16xbf16, #tpu.memory_space<vmem>>, %arg3: memref<9x16x128xbf16, #tpu.memory_space<vmem>>, %arg4: memref<1x128xf32, #tpu.memory_space<vmem>>, %arg5: memref<1x1x96x128xbf16, #tpu.memory_space<vmem>>) attributes {dimension_semantics = [#tpu.dimension_semantics<parallel>, #tpu.dimension_semantics<parallel>], iteration_bounds = array<i64: 2, 8>, scalar_prefetch = 0 : i64, scratch_operands = 0 : i64, tpu.core_type = #tpu.core_type<tc>, window_params = [{transform_indices = @transform_0, window_bounds = array<i64: 1, 10, 8, 16, 16>}, {pipeline_mode = #tpu.pipeline_mode<synchronous>, transform_indices = @transform_1, window_bounds = array<i64: 9, 16, 128>}, {pipeline_mode = #tpu.pipeline_mode<synchronous>, transform_indices = @transform_2, window_bounds = array<i64: 1, 128>}, {transform_indices = @transform_3, window_bounds = array<i64: 1, 1, 96, 128>}]} {
    %cst = arith.constant 0.000000e+00 : f32
    %0 = vector.broadcast %cst : f32 to vector<96x128xf32>
    %c0_i32 = arith.constant 0 : i32
    %1 = arith.addi %arg1, %c0_i32 : i32
    %c0 = arith.constant 0 : index
    %2 = arith.index_cast %1 : i32 to index
    %c0_0 = arith.constant 0 : index
    %c0_1 = arith.constant 0 : index
    %c0_2 = arith.constant 0 : index
    %3 = vector.load %arg2[%c0, %2, %c0_0, %c0_1, %c0_2] : memref<1x10x8x16x16xbf16, #tpu.memory_space<vmem>>, vector<1x1x6x16x16xbf16>
    %4 = vector.shape_cast %3 : vector<1x1x6x16x16xbf16> to vector<1x6x16x16xbf16>
    %5 = vector.shape_cast %4 : vector<1x6x16x16xbf16> to vector<96x16xbf16>
    %c0_3 = arith.constant 0 : index
    %c0_4 = arith.constant 0 : index
    %c0_5 = arith.constant 0 : index
    %6 = vector.load %arg3[%c0_3, %c0_4, %c0_5] : memref<9x16x128xbf16, #tpu.memory_space<vmem>>, vector<1x16x128xbf16>
    %7 = vector.shape_cast %6 : vector<1x16x128xbf16> to vector<16x128xbf16>
    %cst_6 = arith.constant dense<0.000000e+00> : vector<96x128xf32>
    %8 = tpu.matmul %5, %7, %cst_6 {dimension_numbers = #tpu.dot_dimension_numbers<[1], [0], [0], [1], [0, 0, 1, 1], [], []>} : vector<96x16xbf16>, vector<16x128xbf16>, vector<96x128xf32> -> vector<96x128xf32>
    %9 = arith.addf %0, %8 : vector<96x128xf32>
    %c0_i32_7 = arith.constant 0 : i32
    %10 = arith.addi %arg1, %c0_i32_7 : i32
    %c0_8 = arith.constant 0 : index
    %11 = arith.index_cast %10 : i32 to index
    %c1 = arith.constant 1 : index
    %c0_9 = arith.constant 0 : index
    %c0_10 = arith.constant 0 : index
    %12 = vector.load %arg2[%c0_8, %11, %c1, %c0_9, %c0_10] : memref<1x10x8x16x16xbf16, #tpu.memory_space<vmem>>, vector<1x1x6x16x16xbf16>
    %13 = vector.shape_cast %12 : vector<1x1x6x16x16xbf16> to vector<1x6x16x16xbf16>
    %14 = vector.shape_cast %13 : vector<1x6x16x16xbf16> to vector<96x16xbf16>
    %c1_11 = arith.constant 1 : index
    %c0_12 = arith.constant 0 : index
    %c0_13 = arith.constant 0 : index
    %15 = vector.load %arg3[%c1_11, %c0_12, %c0_13] : memref<9x16x128xbf16, #tpu.memory_space<vmem>>, vector<1x16x128xbf16>
    %16 = vector.shape_cast %15 : vector<1x16x128xbf16> to vector<16x128xbf16>
    %cst_14 = arith.constant dense<0.000000e+00> : vector<96x128xf32>
    %17 = tpu.matmul %14, %16, %cst_14 {dimension_numbers = #tpu.dot_dimension_numbers<[1], [0], [0], [1], [0, 0, 1, 1], [], []>} : vector<96x16xbf16>, vector<16x128xbf16>, vector<96x128xf32> -> vector<96x128xf32>
    %18 = arith.addf %9, %17 : vector<96x128xf32>
    %c0_i32_15 = arith.constant 0 : i32
    %19 = arith.addi %arg1, %c0_i32_15 : i32
    %c0_16 = arith.constant 0 : index
    %20 = arith.index_cast %19 : i32 to index
    %c2 = arith.constant 2 : index
    %c0_17 = arith.constant 0 : index
    %c0_18 = arith.constant 0 : index
    %21 = vector.load %arg2[%c0_16, %20, %c2, %c0_17, %c0_18] : memref<1x10x8x16x16xbf16, #tpu.memory_space<vmem>>, vector<1x1x6x16x16xbf16>
    %22 = vector.shape_cast %21 : vector<1x1x6x16x16xbf16> to vector<1x6x16x16xbf16>
    %23 = vector.shape_cast %22 : vector<1x6x16x16xbf16> to vector<96x16xbf16>
    %c2_19 = arith.constant 2 : index
    %c0_20 = arith.constant 0 : index
    %c0_21 = arith.constant 0 : index
    %24 = vector.load %arg3[%c2_19, %c0_20, %c0_21] : memref<9x16x128xbf16, #tpu.memory_space<vmem>>, vector<1x16x128xbf16>
    %25 = vector.shape_cast %24 : vector<1x16x128xbf16> to vector<16x128xbf16>
    %cst_22 = arith.constant dense<0.000000e+00> : vector<96x128xf32>
    %26 = tpu.matmul %23, %25, %cst_22 {dimension_numbers = #tpu.dot_dimension_numbers<[1], [0], [0], [1], [0, 0, 1, 1], [], []>} : vector<96x16xbf16>, vector<16x128xbf16>, vector<96x128xf32> -> vector<96x128xf32>
    %27 = arith.addf %18, %26 : vector<96x128xf32>
    %c1_i32 = arith.constant 1 : i32
    %28 = arith.addi %arg1, %c1_i32 : i32
    %c0_23 = arith.constant 0 : index
    %29 = arith.index_cast %28 : i32 to index
    %c0_24 = arith.constant 0 : index
    %c0_25 = arith.constant 0 : index
    %c0_26 = arith.constant 0 : index
    %30 = vector.load %arg2[%c0_23, %29, %c0_24, %c0_25, %c0_26] : memref<1x10x8x16x16xbf16, #tpu.memory_space<vmem>>, vector<1x1x6x16x16xbf16>
    %31 = vector.shape_cast %30 : vector<1x1x6x16x16xbf16> to vector<1x6x16x16xbf16>
    %32 = vector.shape_cast %31 : vector<1x6x16x16xbf16> to vector<96x16xbf16>
    %c3 = arith.constant 3 : index
    %c0_27 = arith.constant 0 : index
    %c0_28 = arith.constant 0 : index
    %33 = vector.load %arg3[%c3, %c0_27, %c0_28] : memref<9x16x128xbf16, #tpu.memory_space<vmem>>, vector<1x16x128xbf16>
    %34 = vector.shape_cast %33 : vector<1x16x128xbf16> to vector<16x128xbf16>
    %cst_29 = arith.constant dense<0.000000e+00> : vector<96x128xf32>
    %35 = tpu.matmul %32, %34, %cst_29 {dimension_numbers = #tpu.dot_dimension_numbers<[1], [0], [0], [1], [0, 0, 1, 1], [], []>} : vector<96x16xbf16>, vector<16x128xbf16>, vector<96x128xf32> -> vector<96x128xf32>
    %36 = arith.addf %27, %35 : vector<96x128xf32>
    %c1_i32_30 = arith.constant 1 : i32
    %37 = arith.addi %arg1, %c1_i32_30 : i32
    %c0_31 = arith.constant 0 : index
    %38 = arith.index_cast %37 : i32 to index
    %c1_32 = arith.constant 1 : index
    %c0_33 = arith.constant 0 : index
    %c0_34 = arith.constant 0 : index
    %39 = vector.load %arg2[%c0_31, %38, %c1_32, %c0_33, %c0_34] : memref<1x10x8x16x16xbf16, #tpu.memory_space<vmem>>, vector<1x1x6x16x16xbf16>
    %40 = vector.shape_cast %39 : vector<1x1x6x16x16xbf16> to vector<1x6x16x16xbf16>
    %41 = vector.shape_cast %40 : vector<1x6x16x16xbf16> to vector<96x16xbf16>
    %c4 = arith.constant 4 : index
    %c0_35 = arith.constant 0 : index
    %c0_36 = arith.constant 0 : index
    %42 = vector.load %arg3[%c4, %c0_35, %c0_36] : memref<9x16x128xbf16, #tpu.memory_space<vmem>>, vector<1x16x128xbf16>
    %43 = vector.shape_cast %42 : vector<1x16x128xbf16> to vector<16x128xbf16>
    %cst_37 = arith.constant dense<0.000000e+00> : vector<96x128xf32>
    %44 = tpu.matmul %41, %43, %cst_37 {dimension_numbers = #tpu.dot_dimension_numbers<[1], [0], [0], [1], [0, 0, 1, 1], [], []>} : vector<96x16xbf16>, vector<16x128xbf16>, vector<96x128xf32> -> vector<96x128xf32>
    %45 = arith.addf %36, %44 : vector<96x128xf32>
    %c1_i32_38 = arith.constant 1 : i32
    %46 = arith.addi %arg1, %c1_i32_38 : i32
    %c0_39 = arith.constant 0 : index
    %47 = arith.index_cast %46 : i32 to index
    %c2_40 = arith.constant 2 : index
    %c0_41 = arith.constant 0 : index
    %c0_42 = arith.constant 0 : index
    %48 = vector.load %arg2[%c0_39, %47, %c2_40, %c0_41, %c0_42] : memref<1x10x8x16x16xbf16, #tpu.memory_space<vmem>>, vector<1x1x6x16x16xbf16>
    %49 = vector.shape_cast %48 : vector<1x1x6x16x16xbf16> to vector<1x6x16x16xbf16>
    %50 = vector.shape_cast %49 : vector<1x6x16x16xbf16> to vector<96x16xbf16>
    %c5 = arith.constant 5 : index
    %c0_43 = arith.constant 0 : index
    %c0_44 = arith.constant 0 : index
    %51 = vector.load %arg3[%c5, %c0_43, %c0_44] : memref<9x16x128xbf16, #tpu.memory_space<vmem>>, vector<1x16x128xbf16>
    %52 = vector.shape_cast %51 : vector<1x16x128xbf16> to vector<16x128xbf16>
    %cst_45 = arith.constant dense<0.000000e+00> : vector<96x128xf32>
    %53 = tpu.matmul %50, %52, %cst_45 {dimension_numbers = #tpu.dot_dimension_numbers<[1], [0], [0], [1], [0, 0, 1, 1], [], []>} : vector<96x16xbf16>, vector<16x128xbf16>, vector<96x128xf32> -> vector<96x128xf32>
    %54 = arith.addf %45, %53 : vector<96x128xf32>
    %c2_i32 = arith.constant 2 : i32
    %55 = arith.addi %arg1, %c2_i32 : i32
    %c0_46 = arith.constant 0 : index
    %56 = arith.index_cast %55 : i32 to index
    %c0_47 = arith.constant 0 : index
    %c0_48 = arith.constant 0 : index
    %c0_49 = arith.constant 0 : index
    %57 = vector.load %arg2[%c0_46, %56, %c0_47, %c0_48, %c0_49] : memref<1x10x8x16x16xbf16, #tpu.memory_space<vmem>>, vector<1x1x6x16x16xbf16>
    %58 = vector.shape_cast %57 : vector<1x1x6x16x16xbf16> to vector<1x6x16x16xbf16>
    %59 = vector.shape_cast %58 : vector<1x6x16x16xbf16> to vector<96x16xbf16>
    %c6 = arith.constant 6 : index
    %c0_50 = arith.constant 0 : index
    %c0_51 = arith.constant 0 : index
    %60 = vector.load %arg3[%c6, %c0_50, %c0_51] : memref<9x16x128xbf16, #tpu.memory_space<vmem>>, vector<1x16x128xbf16>
    %61 = vector.shape_cast %60 : vector<1x16x128xbf16> to vector<16x128xbf16>
    %cst_52 = arith.constant dense<0.000000e+00> : vector<96x128xf32>
    %62 = tpu.matmul %59, %61, %cst_52 {dimension_numbers = #tpu.dot_dimension_numbers<[1], [0], [0], [1], [0, 0, 1, 1], [], []>} : vector<96x16xbf16>, vector<16x128xbf16>, vector<96x128xf32> -> vector<96x128xf32>
    %63 = arith.addf %54, %62 : vector<96x128xf32>
    %c2_i32_53 = arith.constant 2 : i32
    %64 = arith.addi %arg1, %c2_i32_53 : i32
    %c0_54 = arith.constant 0 : index
    %65 = arith.index_cast %64 : i32 to index
    %c1_55 = arith.constant 1 : index
    %c0_56 = arith.constant 0 : index
    %c0_57 = arith.constant 0 : index
    %66 = vector.load %arg2[%c0_54, %65, %c1_55, %c0_56, %c0_57] : memref<1x10x8x16x16xbf16, #tpu.memory_space<vmem>>, vector<1x1x6x16x16xbf16>
    %67 = vector.shape_cast %66 : vector<1x1x6x16x16xbf16> to vector<1x6x16x16xbf16>
    %68 = vector.shape_cast %67 : vector<1x6x16x16xbf16> to vector<96x16xbf16>
    %c7 = arith.constant 7 : index
    %c0_58 = arith.constant 0 : index
    %c0_59 = arith.constant 0 : index
    %69 = vector.load %arg3[%c7, %c0_58, %c0_59] : memref<9x16x128xbf16, #tpu.memory_space<vmem>>, vector<1x16x128xbf16>
    %70 = vector.shape_cast %69 : vector<1x16x128xbf16> to vector<16x128xbf16>
    %cst_60 = arith.constant dense<0.000000e+00> : vector<96x128xf32>
    %71 = tpu.matmul %68, %70, %cst_60 {dimension_numbers = #tpu.dot_dimension_numbers<[1], [0], [0], [1], [0, 0, 1, 1], [], []>} : vector<96x16xbf16>, vector<16x128xbf16>, vector<96x128xf32> -> vector<96x128xf32>
    %72 = arith.addf %63, %71 : vector<96x128xf32>
    %c2_i32_61 = arith.constant 2 : i32
    %73 = arith.addi %arg1, %c2_i32_61 : i32
    %c0_62 = arith.constant 0 : index
    %74 = arith.index_cast %73 : i32 to index
    %c2_63 = arith.constant 2 : index
    %c0_64 = arith.constant 0 : index
    %c0_65 = arith.constant 0 : index
    %75 = vector.load %arg2[%c0_62, %74, %c2_63, %c0_64, %c0_65] : memref<1x10x8x16x16xbf16, #tpu.memory_space<vmem>>, vector<1x1x6x16x16xbf16>
    %76 = vector.shape_cast %75 : vector<1x1x6x16x16xbf16> to vector<1x6x16x16xbf16>
    %77 = vector.shape_cast %76 : vector<1x6x16x16xbf16> to vector<96x16xbf16>
    %c8 = arith.constant 8 : index
    %c0_66 = arith.constant 0 : index
    %c0_67 = arith.constant 0 : index
    %78 = vector.load %arg3[%c8, %c0_66, %c0_67] : memref<9x16x128xbf16, #tpu.memory_space<vmem>>, vector<1x16x128xbf16>
    %79 = vector.shape_cast %78 : vector<1x16x128xbf16> to vector<16x128xbf16>
    %cst_68 = arith.constant dense<0.000000e+00> : vector<96x128xf32>
    %80 = tpu.matmul %77, %79, %cst_68 {dimension_numbers = #tpu.dot_dimension_numbers<[1], [0], [0], [1], [0, 0, 1, 1], [], []>} : vector<96x16xbf16>, vector<16x128xbf16>, vector<96x128xf32> -> vector<96x128xf32>
    %81 = arith.addf %72, %80 : vector<96x128xf32>
    %c0_69 = arith.constant 0 : index
    %c0_70 = arith.constant 0 : index
    %82 = vector.load %arg4[%c0_69, %c0_70] : memref<1x128xf32, #tpu.memory_space<vmem>>, vector<1x128xf32>
    %83 = vector.broadcast %82 : vector<1x128xf32> to vector<96x128xf32>
    %84 = arith.addf %81, %83 : vector<96x128xf32>
    %85 = arith.truncf %84 : vector<96x128xf32> to vector<96x128xbf16>
    %c0_71 = arith.constant 0 : index
    %c0_72 = arith.constant 0 : index
    %c0_73 = arith.constant 0 : index
    %c0_74 = arith.constant 0 : index
    %86 = vector.load %arg5[%c0_71, %c0_72, %c0_73, %c0_74] : memref<1x1x96x128xbf16, #tpu.memory_space<vmem>>, vector<1x1x96x128xbf16>
    %87 = vector.shape_cast %86 : vector<1x1x96x128xbf16> to vector<96x128xbf16>
    %88 = vector.shape_cast %85 : vector<96x128xbf16> to vector<1x1x96x128xbf16>
    tpu.vector_store %arg5[%c0_71, %c0_72, %c0_73, %c0_74], %88 {strides = array<i32>} : memref<1x1x96x128xbf16, #tpu.memory_space<vmem>>, vector<1x1x96x128xbf16>,
    return
  }
  func.func @transform_0(%arg0: i32, %arg1: i32) -> (i32, i32, i32, i32, i32) {
    %c0_i32 = arith.constant 0 : i32
    %c0_i32_0 = arith.constant 0 : i32
    %c0_i32_1 = arith.constant 0 : i32
    %c0_i32_2 = arith.constant 0 : i32
    %c0_i32_3 = arith.constant 0 : i32
    return %arg0, %c0_i32, %c0_i32_0, %c0_i32_1, %c0_i32_2 : i32, i32, i32, i32, i32
  }
  func.func @transform_1(%arg0: i32, %arg1: i32) -> (i32, i32, i32) {
    %c0_i32 = arith.constant 0 : i32
    %c0_i32_0 = arith.constant 0 : i32
    %c0_i32_1 = arith.constant 0 : i32
    %c0_i32_2 = arith.constant 0 : i32
    return %c0_i32, %c0_i32_0, %c0_i32_1 : i32, i32, i32
  }
  func.func @transform_2(%arg0: i32, %arg1: i32) -> (i32, i32) {
    %c0_i32 = arith.constant 0 : i32
    %c0_i32_0 = arith.constant 0 : i32
    %c0_i32_1 = arith.constant 0 : i32
    return %c0_i32, %c0_i32_0 : i32, i32
  }
  func.func @transform_3(%arg0: i32, %arg1: i32) -> (i32, i32, i32, i32) {
    %c0_i32 = arith.constant 0 : i32
    %c0_i32_0 = arith.constant 0 : i32
    %c0_i32_1 = arith.constant 0 : i32
    return %arg0, %arg1, %c0_i32, %c0_i32_0 : i32, i32, i32, i32
  }
}

</mosaic_0001>

<llo_original>
// kernel: tpu_custom_call.1
$region0: #{tpu_custom_call.1}
  #allocation0 [shape = 'u32[]', space=smem, size = 0x4, offset = 0x4, fixed_abs, tag = 'smem constant byte address 0x4 - core index']
  #allocation1 [shape = 'u32[144,128]{1,0:T(1,128)}', space=vmem, size = 0x12000, scoped, tag = 'internal scratch']
  %s0 = inlined_call_operand.hbm [shape: bf16[2,10,8,16,16], index: 0, kind: input, shape index: {}]
  %s1 = inlined_call_operand.hbm [shape: bf16[9,16,128], index: 1, kind: input, shape index: {}]
  %s2 = inlined_call_operand.vmem [shape: f32[1,128], index: 2, kind: input, shape index: {}]
  %s3 = inlined_call_operand.hbm [shape: bf16[2,8,96,128], index: 3, kind: output, shape index: {}]
  %s4 = sld [smem:[#allocation0]]
  $region53: #{tpu_custom_call.1} parent=0
    _
  %s6 = ssub.s32 1, %s4
  %s7 = scalar_select 0, %s6, %s4
  $region1: #{tpu_custom_call.1} parent=0
    #allocation2 [shape = 'u8[655360]{0}', space=vmem, size = 0xa0000, scoped, tag = 'input window, operand 0']
    #allocation3 [shape = 's32[2]{0}', space=sflag, size = 0x8, scoped, tag = 'scoped memory for tpu_custom_call.1']
    #allocation4 [shape = 's32[2]{0}', space=sflag, size = 0x8, scoped, tag = 'scoped memory for tpu_custom_call.1']
    #allocation5 [shape = 'u8[36864]{0}', space=vmem, size = 0x9000, scoped, tag = 'input window, operand 1, single buffered']
    #allocation6 [shape = 's32[1]{0}', space=sflag, size = 0x4, scoped, tag = 'scoped memory for tpu_custom_call.1']
    #allocation7 [shape = 'u8[49152]{0}', space=vmem, size = 0xc000, scoped, tag = 'output window, operand 0']
    %8 = vsyncpa [#allocation3], 0
    %s9 = scalar_lea.sflag [#allocation3], 1
    %10 = vsyncpa %s9, 0
    %11 = vsyncpa [#allocation6], 0
    %12 = vsyncpa [#allocation4], 0
    %s13 = scalar_lea.sflag [#allocation4], 1
    %14 = vsyncpa %s13, 0
    loop: start=0, step=1, limit=18
    $region2: #{tpu_custom_call.1} parent=1 // loop_pre_header
      _
    $region3: #{tpu_custom_call.1} parent=1 // loop_header
      %s16 = sphi 0, %s20
      %p17 = scmp.ge.s32.totalorder %s16, 18
      %s23 = sphi 0, %s35
      %s24 = sphi 0, %s31
      %s25 = sphi 0, %s23
      %s26 = sphi 0, %s24
      %s27 = sphi 0, %s25
      %s28 = sphi 0, %s26
      %s38 = sphi 0, %s40
      %s41 = sphi 0, %s38
      %s42 = sphi 0, %s41
      %s58 = sphi 0, %s42
      %s62 = sphi 0, %s62
      %s64 = sphi 0, %s62
      %s65 = sphi 0, %s64
      %s79 = sphi 0, %s65
      %s83 = sphi 0, %s83
      %s85 = sphi 0, %s83
      %s86 = sphi 0, %s85
      %s100 = sphi 0, %s86
      %s108 = sphi 0, %s110
      %s111 = sphi 0, %s108
      %s112 = sphi 0, %s111
      %s128 = sphi 0, %s112
    $region4: #{tpu_custom_call.1} parent=1 // loop_header_branch
      %19 = sbr.rel (%p17) target = $region8
    $region5: #{tpu_custom_call.1} parent=1 // loop_body
      %s21 = ssub.s32 %s16, 1
      %s22 = ssub.s32 %s16, 2
      %s29 = sadd.s32 1, %s24
      %p30 = scmp.ge.s32.totalorder %s29, 8
      %s31 = scalar_select %p30, 0, %s29
      %s32 = sadd.s32 1, %s23
      %s33 = scalar_select %p30, %s32, %s23
      %p34 = scmp.ge.s32.totalorder %s33, 2
      %s35 = scalar_select %p34, 0, %s33
      %s36 = ssub.s32 %s23, %s35
      %p37 = scmp.eq.s32.totalorder %s36, 0
      %s39 = sadd.s32 %s38, 1
      %s40 = scalar_select %p37, %s38, %s39
      %p43 = pneg %p37
      %p44 = scmp.eq.s32.totalorder %s16, 15
      %p45 = por %p43, %p44
      %p46 = scmp.ne.s32.totalorder %s38, %s41
      %p47 = scmp.eq.s32.totalorder %s16, 0
      %p48 = por %p46, %p47
      %p49 = scmp.ne.s32.totalorder %s38, %s41
      %p50 = scmp.eq.s32.totalorder %s21, 15
      %p51 = por %p49, %p50
      %p52 = scmp.ne.s32.totalorder %s41, %s42
      %p53 = scmp.eq.s32.totalorder %s21, 0
      %p54 = por %p52, %p53
      %p55 = scmp.ne.s32.totalorder %s41, %s42
      %p56 = scmp.eq.s32.totalorder %s22, 15
      %p57 = por %p55, %p56
      %p59 = scmp.ne.s32.totalorder %s42, %s58
      %p60 = scmp.eq.s32.totalorder %s22, 0
      %p61 = por %p59, %p60
      %s63 = sadd.s32 %s62, 1
      %p66 = scmp.eq.s32.totalorder %s16, 15
      %p67 = scmp.ne.s32.totalorder %s62, %s64
      %p68 = scmp.eq.s32.totalorder %s16, 0
      %p69 = por %p67, %p68
      %p70 = scmp.ne.s32.totalorder %s62, %s64
      %p71 = scmp.eq.s32.totalorder %s21, 15
      %p72 = por %p70, %p71
      %p73 = scmp.ne.s32.totalorder %s64, %s65
      %p74 = scmp.eq.s32.totalorder %s21, 0
      %p75 = por %p73, %p74
      %p76 = scmp.ne.s32.totalorder %s64, %s65
      %p77 = scmp.eq.s32.totalorder %s22, 15
      %p78 = por %p76, %p77
      %p80 = scmp.ne.s32.totalorder %s65, %s79
      %p81 = scmp.eq.s32.totalorder %s22, 0
      %p82 = por %p80, %p81
      %s84 = sadd.s32 %s83, 1
      %p87 = scmp.eq.s32.totalorder %s16, 15
      %p88 = scmp.ne.s32.totalorder %s83, %s85
      %p89 = scmp.eq.s32.totalorder %s16, 0
      %p90 = por %p88, %p89
      %p91 = scmp.ne.s32.totalorder %s83, %s85
      %p92 = scmp.eq.s32.totalorder %s21, 15
      %p93 = por %p91, %p92
      %p94 = scmp.ne.s32.totalorder %s85, %s86
      %p95 = scmp.eq.s32.totalorder %s21, 0
      %p96 = por %p94, %p95
      %p97 = scmp.ne.s32.totalorder %s85, %s86
      %p98 = scmp.eq.s32.totalorder %s22, 15
      %p99 = por %p97, %p98
      %p101 = scmp.ne.s32.totalorder %s86, %s100
      %p102 = scmp.eq.s32.totalorder %s22, 0
      %p103 = por %p101, %p102
      %s104 = ssub.s32 %s23, %s35
      %s105 = ssub.s32 %s24, %s31
      %s106 = sor.u32 %s104, %s105
      %p107 = scmp.eq.s32.totalorder %s106, 0
      %s109 = sadd.s32 %s108, 1
      %s110 = scalar_select %p107, %s108, %s109
      %p113 = pneg %p107
      %p114 = scmp.eq.s32.totalorder %s16, 15
      %p115 = por %p113, %p114
      %p116 = scmp.ne.s32.totalorder %s108, %s111
      %p117 = scmp.eq.s32.totalorder %s16, 0
      %p118 = por %p116, %p117
      %p119 = scmp.ne.s32.totalorder %s108, %s111
      %p120 = scmp.eq.s32.totalorder %s21, 15
      %p121 = por %p119, %p120
      %p122 = scmp.ne.s32.totalorder %s111, %s112
      %p123 = scmp.eq.s32.totalorder %s21, 0
      %p124 = por %p122, %p123
      %p125 = scmp.ne.s32.totalorder %s111, %s112
      %p126 = scmp.eq.s32.totalorder %s22, 15
      %p127 = por %p125, %p126
      %p129 = scmp.ne.s32.totalorder %s112, %s128
      %p130 = scmp.eq.s32.totalorder %s22, 0
      %p131 = por %p129, %p130
      %p132 = scmp.le.s32.totalorder 1, %s16
      %p133 = scmp.lt.s32.totalorder %s16, 17
      %p134 = pnand %p132, %p133
      %p135 = pneg %p134
      // Predicated region
      $region9: #{tpu_custom_call.1} parent=5 // pred_check
        _
      $region10: #{tpu_custom_call.1} parent=5 // pred_check_branch
        %137 = sbr.rel (%p134) target = $region12
      $region11: #{tpu_custom_call.1} parent=5 // pred_region
        %s138 = ssub.s32 %s16, 1
        // Predicated region
        $region13: #{tpu_custom_call.1} parent=11 // pred_check
          %p139 = pneg %p75
        $region14: #{tpu_custom_call.1} parent=11 // pred_check_branch
          %141 = sbr.rel (%p139) target = $region16
        $region15: #{tpu_custom_call.1} parent=11 // pred_region
          %s143 = ssub.s32 1152, 1152
          %144 = vsyncadd [#allocation6], %s143
          %s145 = sshll.u32 [#allocation5], 4
          %s146 = int_to_ptr.vmem [resolvable:$true] %s145
          %151 = dma.hbm_to_vmem [thread:$0]  %s1, 1152, %s146, [#allocation6], 64, 64, 4
        $region16: #{tpu_custom_call.1} parent=11 // pred_fallthru
          _
        // Predicated region
        $region17: #{tpu_custom_call.1} parent=11 // pred_check
          %p152 = pneg %p96
        $region18: #{tpu_custom_call.1} parent=11 // pred_check_branch
          %154 = sbr.rel (%p152) target = $region20
        $region19: #{tpu_custom_call.1} parent=11 // pred_region
          _
        $region20: #{tpu_custom_call.1} parent=11 // pred_fallthru
          _
      $region12: #{tpu_custom_call.1} parent=5 // pred_fallthru
        _
      %p155 = scmp.lt.s32.totalorder %s16, 16
      // Predicated region
      $region21: #{tpu_custom_call.1} parent=5 // pred_check
        %p156 = pneg %p155
      $region22: #{tpu_custom_call.1} parent=5 // pred_check_branch
        %158 = sbr.rel (%p156) target = $region24
      $region23: #{tpu_custom_call.1} parent=5 // pred_region
        // Predicated region
        $region25: #{tpu_custom_call.1} parent=23 // pred_check
          %p159 = pneg %p48
        $region26: #{tpu_custom_call.1} parent=23 // pred_check_branch
          %161 = sbr.rel (%p159) target = $region28
        $region27: #{tpu_custom_call.1} parent=23 // pred_region
          %s162 = sand.u32 %s38, 1
          %s163 = scalar_lea.sflag [#allocation3], %s162
          %s164 = sand.u32 %s38, 1
          %s165 = smul.addr %s164, 640
          %s166 = scalar_lea.vmem [#allocation2], %s165
          %s168 = ssub.s32 10240, 10240
          %169 = vsyncadd %s163, %s168
          %s170 = smul.addr %s23, 160
          %s171 = smul.addr %s170, 64
          %s172 = scalar_lea.hbm %s0, %s171
          %s173 = sshll.u32 %s166, 4
          %s174 = int_to_ptr.vmem [resolvable:$true] %s173
          %179 = dma.hbm_to_vmem [thread:$0]  %s172, 10240, %s174, %s163, 64, 64, 4
        $region28: #{tpu_custom_call.1} parent=23 // pred_fallthru
          _
      $region24: #{tpu_custom_call.1} parent=5 // pred_fallthru
        _
      %p180 = scmp.le.s32.totalorder 1, %s16
      %p181 = scmp.lt.s32.totalorder %s16, 17
      %p182 = pnand %p180, %p181
      %p183 = pneg %p182
      // Predicated region
      $region29: #{tpu_custom_call.1} parent=5 // pred_check
        _
      $region30: #{tpu_custom_call.1} parent=5 // pred_check_branch
        %185 = sbr.rel (%p182) target = $region32
      $region31: #{tpu_custom_call.1} parent=5 // pred_region
        %s186 = ssub.s32 %s16, 1
        %s187 = sand.u32 %s41, 1
        %s188 = scalar_lea.sflag [#allocation3], %s187
        %s189 = sand.u32 %s41, 1
        %s190 = smul.addr %s189, 640
        %s191 = scalar_lea.vmem [#allocation2], %s190
        // Predicated region
        $region33: #{tpu_custom_call.1} parent=31 // pred_check
          %p192 = pneg %p54
        $region34: #{tpu_custom_call.1} parent=31 // pred_check_branch
          %194 = sbr.rel (%p192) target = $region36
        $region35: #{tpu_custom_call.1} parent=31 // pred_region
          %195 = dma.done %s188, 10240
        $region36: #{tpu_custom_call.1} parent=31 // pred_fallthru
          _
        // Predicated region
        $region37: #{tpu_custom_call.1} parent=31 // pred_check
          %p196 = pneg %p75
        $region38: #{tpu_custom_call.1} parent=31 // pred_check_branch
          %198 = sbr.rel (%p196) target = $region40
        $region39: #{tpu_custom_call.1} parent=31 // pred_region
          %199 = dma.done [#allocation6], 1152
        $region40: #{tpu_custom_call.1} parent=31 // pred_fallthru
          _
        %s200 = sand.u32 %s41, 1
        %s201 = scalar_lea.sflag [#allocation3], %s200
        %s202 = sand.u32 %s41, 1
        %s203 = smul.addr %s202, 640
        %s204 = scalar_lea.vmem [#allocation2], %s203
        %p205 = pneg %p54
        %p206 = pneg %p51
        %p207 = pneg %p75
        %p208 = pneg %p72
        %p209 = pneg %p96
        %p210 = pneg %p93
        %p211 = pneg %p124
        %p212 = pneg %p121
        %s213 = sand.u32 %s111, 1
        %s214 = scalar_lea.sflag [#allocation4], %s213
        %s215 = sand.u32 %s111, 1
        %s216 = smul.addr %s215, 48
        %s217 = scalar_lea.vmem [#allocation7], %s216
        %s219 = smul.u32 %s26, 16
        %s220 = smul.addr %s219, 4
        %s221 = scalar_lea.vmem %s191, %s220 [#allocation2]
        %v222 = vld [vmem:[%s221] sm:$0xf]
        %v223 = vld [vmem:[%s221 + $0x4] sm:$0xf]
        %v224 = vld [vmem:[%s221 + $0x8] sm:$0xf]
        %v225 = vld [vmem:[%s221 + $0xc] sm:$0xf]
        %v226 = vld [vmem:[%s221 + $0x10] sm:$0xf]
        %v227 = vld [vmem:[%s221 + $0x14] sm:$0xf]
        %v228 = vld [vmem:[%s221 + $0x18] sm:$0xf]
        %v229 = vld [vmem:[%s221 + $0x1c] sm:$0xf]
        %v230 = vld [vmem:[%s221 + $0x20] sm:$0xf]
        %v231 = vld [vmem:[%s221 + $0x24] sm:$0xf]
        %v232 = vld [vmem:[%s221 + $0x28] sm:$0xf]
        %v233 = vld [vmem:[%s221 + $0x2c] sm:$0xf]
        %v234 = vld [vmem:[#allocation5] sm:$0xf]
        %v235 = vld [vmem:[#allocation5 + $0x4] sm:$0xf]
        %s236 = sadd.s32 2, %s219
        %s237 = smul.addr %s236, 4
        %s238 = scalar_lea.vmem %s191, %s237 [#allocation2]
        %v239 = vld [vmem:[%s238] sm:$0xf]
        %v240 = vld [vmem:[%s238 + $0x4] sm:$0xf]
        %v241 = vld [vmem:[%s238 + $0x8] sm:$0xf]
        %v242 = vld [vmem:[%s238 + $0xc] sm:$0xf]
        %v243 = vld [vmem:[%s238 + $0x10] sm:$0xf]
        %v244 = vld [vmem:[%s238 + $0x14] sm:$0xf]
        %v245 = vld [vmem:[%s238 + $0x18] sm:$0xf]
        %v246 = vld [vmem:[%s238 + $0x1c] sm:$0xf]
        %v247 = vld [vmem:[%s238 + $0x20] sm:$0xf]
        %v248 = vld [vmem:[%s238 + $0x24] sm:$0xf]
        %v249 = vld [vmem:[%s238 + $0x28] sm:$0xf]
        %v250 = vld [vmem:[%s238 + $0x2c] sm:$0xf]
        %s251 = scalar_lea.vmem [#allocation5], 8
        %v252 = vld [vmem:[%s251] sm:$0xf]
        %v253 = vld [vmem:[%s251 + $0x4] sm:$0xf]
        %v266 = vunpack.c.l.b16 %v239
        %v267 = vunpack.c.l.b16 %v240
        %v268 = vunpack.c.l.b16 %v241
        %v269 = vunpack.c.l.b16 %v242
        %v270 = vunpack.c.l.b16 %v243
        %v271 = vunpack.c.l.b16 %v244
        %v272 = vunpack.c.l.b16 %v245
        %v273 = vunpack.c.l.b16 %v246
        %v274 = vunpack.c.l.b16 %v247
        %v275 = vunpack.c.l.b16 %v248
        %v276 = vunpack.c.l.b16 %v249
        %v277 = vunpack.c.l.b16 %v250
        %v278 = vpack.c.b16 %v267, %v266
        %v279 = vpack.c.b16 %v269, %v268
        %v280 = vpack.c.b16 %v271, %v270
        %v281 = vpack.c.b16 %v273, %v272
        %v282 = vpack.c.b16 %v275, %v274
        %v283 = vpack.c.b16 %v277, %v276
        %v286 = vunpack.c.l.b16 %v252
        %v287 = vunpack.c.l.b16 %v253
        %v288 = vpack.c.b16 %v287, %v286
        %vm290 = vcmask 130048
        %v292 = vsel %vm290, %v278, 0
        %v295 = vsel %vm290, %v279, 0
        %v298 = vsel %vm290, %v280, 0
        %v301 = vsel %vm290, %v281, 0
        %v304 = vsel %vm290, %v282, 0
        %v307 = vsel %vm290, %v283, 0
        %309 = vmatprep.subr.bf16.mxu0 0
        %310 = vmatpush1.bf16.msra.mxu0 %v288
        %311 = vmatprep.subr.bf16.mxu0 0
        %312 = vmatpush1.bf16.msra.mxu0 0
        %313 = vmatprep.subr.bf16.mxu0 0
        %314 = vmatpush1.bf16.msra.mxu0 0
        %315 = vmatprep.subr.bf16.mxu0 0
        %316 = vmatpush1.bf16.msra.mxu0 0
        %317 = vmatprep.subr.bf16.mxu0 0
        %318 = vmatpush1.bf16.msra.mxu0 0
        %319 = vmatprep.subr.bf16.mxu0 0
        %320 = vmatpush1.bf16.msra.mxu0 0
        %321 = vmatprep.subr.bf16.mxu0 0
        %322 = vmatpush1.bf16.msra.mxu0 0
        %323 = vmatprep.subr.bf16.mxu0 0
        %324 = vmatpush1.bf16.msra.mxu0 0
        %325 = vmatprep.subr.bf16.mxu0 0
        %326 = vmatpush1.bf16.msra.mxu0 0
        %327 = vmatprep.subr.bf16.mxu0 0
        %328 = vmatpush1.bf16.msra.mxu0 0
        %329 = vmatprep.subr.bf16.mxu0 0
        %330 = vmatpush1.bf16.msra.mxu0 0
        %331 = vmatprep.subr.bf16.mxu0 0
        %332 = vmatpush1.bf16.msra.mxu0 0
        %333 = vmatprep.subr.bf16.mxu0 0
        %334 = vmatpush1.bf16.msra.mxu0 0
        %335 = vmatprep.subr.bf16.mxu0 0
        %336 = vmatpush1.bf16.msra.mxu0 0
        %337 = vmatprep.subr.bf16.mxu0 0
        %338 = vmatpush1.bf16.msra.mxu0 0
        %339 = vmatprep.subr.bf16.mxu0 0
        %340 = vmatpush1.bf16.msra.mxu0 0
        %341 = vmatprep.mubr.bf16.mxu0 0
        %342 = vmatmul.mubr.bf16.gmra.mrb[0].mxu0 %v292
        %v343 = vpop.f32.mrb[0].mxu0
        %v344 = vadd.f32 0.0, %v343
        %v345 = vpop.f32.mrb[0].mxu0
        %v346 = vpop.f32.mrb[0].mxu0
        %v347 = vadd.f32 0.0, %v346
        %v348 = vpop.f32.mrb[0].mxu0
        %349 = vmatprep.mubr.bf16.mxu0 0
        %350 = vmatmul.mubr.bf16.gmra.mrb[0].mxu0 %v295
        %v351 = vpop.f32.mrb[0].mxu0
        %v352 = vadd.f32 0.0, %v351
        %v353 = vpop.f32.mrb[0].mxu0
        %v354 = vpop.f32.mrb[0].mxu0
        %v355 = vadd.f32 0.0, %v354
        %v356 = vpop.f32.mrb[0].mxu0
        %357 = vmatprep.mubr.bf16.mxu0 0
        %358 = vmatmul.mubr.bf16.gmra.mrb[0].mxu0 %v298
        %v359 = vpop.f32.mrb[0].mxu0
        %v360 = vadd.f32 0.0, %v359
        %v361 = vpop.f32.mrb[0].mxu0
        %v362 = vpop.f32.mrb[0].mxu0
        %v363 = vadd.f32 0.0, %v362
        %v364 = vpop.f32.mrb[0].mxu0
        %365 = vmatprep.mubr.bf16.mxu0 0
        %366 = vmatmul.mubr.bf16.gmra.mrb[0].mxu0 %v301
        %v367 = vpop.f32.mrb[0].mxu0
        %v368 = vadd.f32 0.0, %v367
        %v369 = vpop.f32.mrb[0].mxu0
        %v370 = vpop.f32.mrb[0].mxu0
        %v371 = vadd.f32 0.0, %v370
        %v372 = vpop.f32.mrb[0].mxu0
        %373 = vmatprep.mubr.bf16.mxu0 0
        %374 = vmatmul.mubr.bf16.gmra.mrb[0].mxu0 %v304
        %v375 = vpop.f32.mrb[0].mxu0
        %v376 = vadd.f32 0.0, %v375
        %v377 = vpop.f32.mrb[0].mxu0
        %v378 = vpop.f32.mrb[0].mxu0
        %v379 = vadd.f32 0.0, %v378
        %v380 = vpop.f32.mrb[0].mxu0
        %381 = vmatprep.mubr.bf16.mxu0 0
        %382 = vmatmul.mubr.bf16.gmra.mrb[0].mxu0 %v307
        %v383 = vpop.f32.mrb[0].mxu0
        %v384 = vadd.f32 0.0, %v383
        %v385 = vpop.f32.mrb[0].mxu0
        %v386 = vpop.f32.mrb[0].mxu0
        %v387 = vadd.f32 0.0, %v386
        %v388 = vpop.f32.mrb[0].mxu0
        %389 = vdwg.mxu0
        %v402 = vunpack.c.l.b16 %v222
        %v403 = vunpack.c.l.b16 %v223
        %v404 = vunpack.c.l.b16 %v224
        %v405 = vunpack.c.l.b16 %v225
        %v406 = vunpack.c.l.b16 %v226
        %v407 = vunpack.c.l.b16 %v227
        %v408 = vunpack.c.l.b16 %v228
        %v409 = vunpack.c.l.b16 %v229
        %v410 = vunpack.c.l.b16 %v230
        %v411 = vunpack.c.l.b16 %v231
        %v412 = vunpack.c.l.b16 %v232
        %v413 = vunpack.c.l.b16 %v233
        %v414 = vpack.c.b16 %v403, %v402
        %v415 = vpack.c.b16 %v405, %v404
        %v416 = vpack.c.b16 %v407, %v406
        %v417 = vpack.c.b16 %v409, %v408
        %v418 = vpack.c.b16 %v411, %v410
        %v419 = vpack.c.b16 %v413, %v412
        %v422 = vunpack.c.l.b16 %v234
        %v423 = vunpack.c.l.b16 %v235
        %v424 = vpack.c.b16 %v423, %v422
        %v427 = vsel %vm290, %v414, 0
        %v430 = vsel %vm290, %v415, 0
        %v433 = vsel %vm290, %v416, 0
        %v436 = vsel %vm290, %v417, 0
        %v439 = vsel %vm290, %v418, 0
        %v442 = vsel %vm290, %v419, 0
        %444 = vmatprep.subr.bf16.mxu0 0
        %445 = vmatpush1.bf16.msra.mxu0 %v424
        %446 = vmatprep.subr.bf16.mxu0 0
        %447 = vmatpush1.bf16.msra.mxu0 0
        %448 = vmatprep.subr.bf16.mxu0 0
        %449 = vmatpush1.bf16.msra.mxu0 0
        %450 = vmatprep.subr.bf16.mxu0 0
        %451 = vmatpush1.bf16.msra.mxu0 0
        %452 = vmatprep.subr.bf16.mxu0 0
        %453 = vmatpush1.bf16.msra.mxu0 0
        %454 = vmatprep.subr.bf16.mxu0 0
        %455 = vmatpush1.bf16.msra.mxu0 0
        %456 = vmatprep.subr.bf16.mxu0 0
        %457 = vmatpush1.bf16.msra.mxu0 0
        %458 = vmatprep.subr.bf16.mxu0 0
        %459 = vmatpush1.bf16.msra.mxu0 0
        %460 = vmatprep.subr.bf16.mxu0 0
        %461 = vmatpush1.bf16.msra.mxu0 0
        %462 = vmatprep.subr.bf16.mxu0 0
        %463 = vmatpush1.bf16.msra.mxu0 0
        %464 = vmatprep.subr.bf16.mxu0 0
        %465 = vmatpush1.bf16.msra.mxu0 0
        %466 = vmatprep.subr.bf16.mxu0 0
        %467 = vmatpush1.bf16.msra.mxu0 0
        %468 = vmatprep.subr.bf16.mxu0 0
        %469 = vmatpush1.bf16.msra.mxu0 0
        %470 = vmatprep.subr.bf16.mxu0 0
        %471 = vmatpush1.bf16.msra.mxu0 0
        %472 = vmatprep.subr.bf16.mxu0 0
        %473 = vmatpush1.bf16.msra.mxu0 0
        %474 = vmatprep.subr.bf16.mxu0 0
        %475 = vmatpush1.bf16.msra.mxu0 0
        %476 = vmatprep.mubr.bf16.mxu0 0
        %477 = vmatmul.mubr.bf16.gmra.mrb[0].mxu0 %v427
        %v478 = vpop.f32.mrb[0].mxu0
        %v479 = vadd.f32 %v344, %v478
        %v480 = vpop.f32.mrb[0].mxu0
        %v481 = vpop.f32.mrb[0].mxu0
        %v482 = vadd.f32 %v347, %v481
        %v483 = vpop.f32.mrb[0].mxu0
        %484 = vmatprep.mubr.bf16.mxu0 0
        %485 = vmatmul.mubr.bf16.gmra.mrb[0].mxu0 %v430
        %v486 = vpop.f32.mrb[0].mxu0
        %v487 = vadd.f32 %v352, %v486
        %v488 = vpop.f32.mrb[0].mxu0
        %v489 = vpop.f32.mrb[0].mxu0
        %v490 = vadd.f32 %v355, %v489
        %v491 = vpop.f32.mrb[0].mxu0
        %492 = vmatprep.mubr.bf16.mxu0 0
        %493 = vmatmul.mubr.bf16.gmra.mrb[0].mxu0 %v433
        %v494 = vpop.f32.mrb[0].mxu0
        %v495 = vadd.f32 %v360, %v494
        %v496 = vpop.f32.mrb[0].mxu0
        %v497 = vpop.f32.mrb[0].mxu0
        %v498 = vadd.f32 %v363, %v497
        %v499 = vpop.f32.mrb[0].mxu0
        %500 = vmatprep.mubr.bf16.mxu0 0
        %501 = vmatmul.mubr.bf16.gmra.mrb[0].mxu0 %v436
        %v502 = vpop.f32.mrb[0].mxu0
        %v503 = vadd.f32 %v368, %v502
        %v504 = vpop.f32.mrb[0].mxu0
        %v505 = vpop.f32.mrb[0].mxu0
        %v506 = vadd.f32 %v371, %v505
        %v507 = vpop.f32.mrb[0].mxu0
        %508 = vmatprep.mubr.bf16.mxu0 0
        %509 = vmatmul.mubr.bf16.gmra.mrb[0].mxu0 %v439
        %v510 = vpop.f32.mrb[0].mxu0
        %v511 = vadd.f32 %v376, %v510
        %v512 = vpop.f32.mrb[0].mxu0
        %v513 = vpop.f32.mrb[0].mxu0
        %v514 = vadd.f32 %v379, %v513
        %v515 = vpop.f32.mrb[0].mxu0
        %516 = vmatprep.mubr.bf16.mxu0 0
        %517 = vmatmul.mubr.bf16.gmra.mrb[0].mxu0 %v442
        %v518 = vpop.f32.mrb[0].mxu0
        %v519 = vadd.f32 %v384, %v518
        %v520 = vpop.f32.mrb[0].mxu0
        %v521 = vpop.f32.mrb[0].mxu0
        %v522 = vadd.f32 %v387, %v521
        %v523 = vpop.f32.mrb[0].mxu0
        %524 = vdwg.mxu0
        %s525 = sadd.s32 4, %s219
        %s526 = smul.addr %s525, 4
        %s527 = scalar_lea.vmem %s191, %s526 [#allocation2]
        %v528 = vld [vmem:[%s527] sm:$0xf]
        %v529 = vld [vmem:[%s527 + $0x4] sm:$0xf]
        %v530 = vld [vmem:[%s527 + $0x8] sm:$0xf]
        %v531 = vld [vmem:[%s527 + $0xc] sm:$0xf]
        %v532 = vld [vmem:[%s527 + $0x10] sm:$0xf]
        %v533 = vld [vmem:[%s527 + $0x14] sm:$0xf]
        %v534 = vld [vmem:[%s527 + $0x18] sm:$0xf]
        %v535 = vld [vmem:[%s527 + $0x1c] sm:$0xf]
        %v536 = vld [vmem:[%s527 + $0x20] sm:$0xf]
        %v537 = vld [vmem:[%s527 + $0x24] sm:$0xf]
        %v538 = vld [vmem:[%s527 + $0x28] sm:$0xf]
        %v539 = vld [vmem:[%s527 + $0x2c] sm:$0xf]
        %s540 = scalar_lea.vmem [#allocation5], 16
        %v541 = vld [vmem:[%s540] sm:$0xf]
        %v542 = vld [vmem:[%s540 + $0x4] sm:$0xf]
        %v555 = vunpack.c.l.b16 %v528
        %v556 = vunpack.c.l.b16 %v529
        %v557 = vunpack.c.l.b16 %v530
        %v558 = vunpack.c.l.b16 %v531
        %v559 = vunpack.c.l.b16 %v532
        %v560 = vunpack.c.l.b16 %v533
        %v561 = vunpack.c.l.b16 %v534
        %v562 = vunpack.c.l.b16 %v535
        %v563 = vunpack.c.l.b16 %v536
        %v564 = vunpack.c.l.b16 %v537
        %v565 = vunpack.c.l.b16 %v538
        %v566 = vunpack.c.l.b16 %v539
        %v567 = vpack.c.b16 %v556, %v555
        %v568 = vpack.c.b16 %v558, %v557
        %v569 = vpack.c.b16 %v560, %v559
        %v570 = vpack.c.b16 %v562, %v561
        %v571 = vpack.c.b16 %v564, %v563
        %v572 = vpack.c.b16 %v566, %v565
        %v575 = vunpack.c.l.b16 %v541
        %v576 = vunpack.c.l.b16 %v542
        %v577 = vpack.c.b16 %v576, %v575
        %v580 = vsel %vm290, %v567, 0
        %v583 = vsel %vm290, %v568, 0
        %v586 = vsel %vm290, %v569, 0
        %v589 = vsel %vm290, %v570, 0
        %v592 = vsel %vm290, %v571, 0
        %v595 = vsel %vm290, %v572, 0
        %597 = vmatprep.subr.bf16.mxu0 0
        %598 = vmatpush1.bf16.msra.mxu0 %v577
        %599 = vmatprep.subr.bf16.mxu0 0
        %600 = vmatpush1.bf16.msra.mxu0 0
        %601 = vmatprep.subr.bf16.mxu0 0
        %602 = vmatpush1.bf16.msra.mxu0 0
        %603 = vmatprep.subr.bf16.mxu0 0
        %604 = vmatpush1.bf16.msra.mxu0 0
        %605 = vmatprep.subr.bf16.mxu0 0
        %606 = vmatpush1.bf16.msra.mxu0 0
        %607 = vmatprep.subr.bf16.mxu0 0
        %608 = vmatpush1.bf16.msra.mxu0 0
        %609 = vmatprep.subr.bf16.mxu0 0
        %610 = vmatpush1.bf16.msra.mxu0 0
        %611 = vmatprep.subr.bf16.mxu0 0
        %612 = vmatpush1.bf16.msra.mxu0 0
        %613 = vmatprep.subr.bf16.mxu0 0
        %614 = vmatpush1.bf16.msra.mxu0 0
        %615 = vmatprep.subr.bf16.mxu0 0
        %616 = vmatpush1.bf16.msra.mxu0 0
        %617 = vmatprep.subr.bf16.mxu0 0
        %618 = vmatpush1.bf16.msra.mxu0 0
        %619 = vmatprep.subr.bf16.mxu0 0
        %620 = vmatpush1.bf16.msra.mxu0 0
        %621 = vmatprep.subr.bf16.mxu0 0
        %622 = vmatpush1.bf16.msra.mxu0 0
        %623 = vmatprep.subr.bf16.mxu0 0
        %624 = vmatpush1.bf16.msra.mxu0 0
        %625 = vmatprep.subr.bf16.mxu0 0
        %626 = vmatpush1.bf16.msra.mxu0 0
        %627 = vmatprep.subr.bf16.mxu0 0
        %628 = vmatpush1.bf16.msra.mxu0 0
        %629 = vmatprep.mubr.bf16.mxu0 0
        %630 = vmatmul.mubr.bf16.gmra.mrb[0].mxu0 %v580
        %v631 = vpop.f32.mrb[0].mxu0
        %v632 = vadd.f32 0.0, %v631
        %v633 = vpop.f32.mrb[0].mxu0
        %v634 = vpop.f32.mrb[0].mxu0
        %v635 = vadd.f32 0.0, %v634
        %v636 = vpop.f32.mrb[0].mxu0
        %637 = vmatprep.mubr.bf16.mxu0 0
        %638 = vmatmul.mubr.bf16.gmra.mrb[0].mxu0 %v583
        %v639 = vpop.f32.mrb[0].mxu0
        %v640 = vadd.f32 0.0, %v639
        %v641 = vpop.f32.mrb[0].mxu0
        %v642 = vpop.f32.mrb[0].mxu0
        %v643 = vadd.f32 0.0, %v642
        %v644 = vpop.f32.mrb[0].mxu0
        %645 = vmatprep.mubr.bf16.mxu0 0
        %646 = vmatmul.mubr.bf16.gmra.mrb[0].mxu0 %v586
        %v647 = vpop.f32.mrb[0].mxu0
        %v648 = vadd.f32 0.0, %v647
        %v649 = vpop.f32.mrb[0].mxu0
        %v650 = vpop.f32.mrb[0].mxu0
        %v651 = vadd.f32 0.0, %v650
        %v652 = vpop.f32.mrb[0].mxu0
        %653 = vmatprep.mubr.bf16.mxu0 0
        %654 = vmatmul.mubr.bf16.gmra.mrb[0].mxu0 %v589
        %v655 = vpop.f32.mrb[0].mxu0
        %v656 = vadd.f32 0.0, %v655
        %v657 = vpop.f32.mrb[0].mxu0
        %v658 = vpop.f32.mrb[0].mxu0
        %v659 = vadd.f32 0.0, %v658
        %v660 = vpop.f32.mrb[0].mxu0
        %661 = vmatprep.mubr.bf16.mxu0 0
        %662 = vmatmul.mubr.bf16.gmra.mrb[0].mxu0 %v592
        %v663 = vpop.f32.mrb[0].mxu0
        %v664 = vadd.f32 0.0, %v663
        %v665 = vpop.f32.mrb[0].mxu0
        %v666 = vpop.f32.mrb[0].mxu0
        %v667 = vadd.f32 0.0, %v666
        %v668 = vpop.f32.mrb[0].mxu0
        %669 = vmatprep.mubr.bf16.mxu0 0
        %670 = vmatmul.mubr.bf16.gmra.mrb[0].mxu0 %v595
        %v671 = vpop.f32.mrb[0].mxu0
        %v672 = vadd.f32 0.0, %v671
        %v673 = vpop.f32.mrb[0].mxu0
        %v674 = vpop.f32.mrb[0].mxu0
        %v675 = vadd.f32 0.0, %v674
        %v676 = vpop.f32.mrb[0].mxu0
        %677 = vdwg.mxu0
        %v678 = vadd.f32 %v479, %v632
        %v679 = vadd.f32 %v482, %v635
        %v680 = vadd.f32 %v487, %v640
        %v681 = vadd.f32 %v490, %v643
        %v682 = vadd.f32 %v495, %v648
        %v683 = vadd.f32 %v498, %v651
        %v684 = vadd.f32 %v503, %v656
        %v685 = vadd.f32 %v506, %v659
        %v686 = vadd.f32 %v511, %v664
        %v687 = vadd.f32 %v514, %v667
        %v688 = vadd.f32 %v519, %v672
        %v689 = vadd.f32 %v522, %v675
        %s690 = sadd.s32 %s26, 1
        %s691 = smul.u32 %s690, 16
        %s692 = smul.addr %s691, 4
        %s693 = scalar_lea.vmem %s191, %s692 [#allocation2]
        %v694 = vld [vmem:[%s693] sm:$0xf]
        %v695 = vld [vmem:[%s693 + $0x4] sm:$0xf]
        %v696 = vld [vmem:[%s693 + $0x8] sm:$0xf]
        %v697 = vld [vmem:[%s693 + $0xc] sm:$0xf]
        %v698 = vld [vmem:[%s693 + $0x10] sm:$0xf]
        %v699 = vld [vmem:[%s693 + $0x14] sm:$0xf]
        %v700 = vld [vmem:[%s693 + $0x18] sm:$0xf]
        %v701 = vld [vmem:[%s693 + $0x1c] sm:$0xf]
        %v702 = vld [vmem:[%s693 + $0x20] sm:$0xf]
        %v703 = vld [vmem:[%s693 + $0x24] sm:$0xf]
        %v704 = vld [vmem:[%s693 + $0x28] sm:$0xf]
        %v705 = vld [vmem:[%s693 + $0x2c] sm:$0xf]
        %s706 = scalar_lea.vmem [#allocation5], 24
        %v707 = vld [vmem:[%s706] sm:$0xf]
        %v708 = vld [vmem:[%s706 + $0x4] sm:$0xf]
        %v721 = vunpack.c.l.b16 %v694
        %v722 = vunpack.c.l.b16 %v695
        %v723 = vunpack.c.l.b16 %v696
        %v724 = vunpack.c.l.b16 %v697
        %v725 = vunpack.c.l.b16 %v698
        %v726 = vunpack.c.l.b16 %v699
        %v727 = vunpack.c.l.b16 %v700
        %v728 = vunpack.c.l.b16 %v701
        %v729 = vunpack.c.l.b16 %v702
        %v730 = vunpack.c.l.b16 %v703
        %v731 = vunpack.c.l.b16 %v704
        %v732 = vunpack.c.l.b16 %v705
        %v733 = vpack.c.b16 %v722, %v721
        %v734 = vpack.c.b16 %v724, %v723
        %v735 = vpack.c.b16 %v726, %v725
        %v736 = vpack.c.b16 %v728, %v727
        %v737 = vpack.c.b16 %v730, %v729
        %v738 = vpack.c.b16 %v732, %v731
        %v741 = vunpack.c.l.b16 %v707
        %v742 = vunpack.c.l.b16 %v708
        %v743 = vpack.c.b16 %v742, %v741
        %v746 = vsel %vm290, %v733, 0
        %v749 = vsel %vm290, %v734, 0
        %v752 = vsel %vm290, %v735, 0
        %v755 = vsel %vm290, %v736, 0
        %v758 = vsel %vm290, %v737, 0
        %v761 = vsel %vm290, %v738, 0
        %763 = vmatprep.subr.bf16.mxu0 0
        %764 = vmatpush1.bf16.msra.mxu0 %v743
        %765 = vmatprep.subr.bf16.mxu0 0
        %766 = vmatpush1.bf16.msra.mxu0 0
        %767 = vmatprep.subr.bf16.mxu0 0
        %768 = vmatpush1.bf16.msra.mxu0 0
        %769 = vmatprep.subr.bf16.mxu0 0
        %770 = vmatpush1.bf16.msra.mxu0 0
        %771 = vmatprep.subr.bf16.mxu0 0
        %772 = vmatpush1.bf16.msra.mxu0 0
        %773 = vmatprep.subr.bf16.mxu0 0
        %774 = vmatpush1.bf16.msra.mxu0 0
        %775 = vmatprep.subr.bf16.mxu0 0
        %776 = vmatpush1.bf16.msra.mxu0 0
        %777 = vmatprep.subr.bf16.mxu0 0
        %778 = vmatpush1.bf16.msra.mxu0 0
        %779 = vmatprep.subr.bf16.mxu0 0
        %780 = vmatpush1.bf16.msra.mxu0 0
        %781 = vmatprep.subr.bf16.mxu0 0
        %782 = vmatpush1.bf16.msra.mxu0 0
        %783 = vmatprep.subr.bf16.mxu0 0
        %784 = vmatpush1.bf16.msra.mxu0 0
        %785 = vmatprep.subr.bf16.mxu0 0
        %786 = vmatpush1.bf16.msra.mxu0 0
        %787 = vmatprep.subr.bf16.mxu0 0
        %788 = vmatpush1.bf16.msra.mxu0 0
        %789 = vmatprep.subr.bf16.mxu0 0
        %790 = vmatpush1.bf16.msra.mxu0 0
        %791 = vmatprep.subr.bf16.mxu0 0
        %792 = vmatpush1.bf16.msra.mxu0 0
        %793 = vmatprep.subr.bf16.mxu0 0
        %794 = vmatpush1.bf16.msra.mxu0 0
        %795 = vmatprep.mubr.bf16.mxu0 0
        %796 = vmatmul.mubr.bf16.gmra.mrb[0].mxu0 %v746
        %v797 = vpop.f32.mrb[0].mxu0
        %v798 = vadd.f32 0.0, %v797
        %v799 = vpop.f32.mrb[0].mxu0
        %v800 = vpop.f32.mrb[0].mxu0
        %v801 = vadd.f32 0.0, %v800
        %v802 = vpop.f32.mrb[0].mxu0
        %803 = vmatprep.mubr.bf16.mxu0 0
        %804 = vmatmul.mubr.bf16.gmra.mrb[0].mxu0 %v749
        %v805 = vpop.f32.mrb[0].mxu0
        %v806 = vadd.f32 0.0, %v805
        %v807 = vpop.f32.mrb[0].mxu0
        %v808 = vpop.f32.mrb[0].mxu0
        %v809 = vadd.f32 0.0, %v808
        %v810 = vpop.f32.mrb[0].mxu0
        %811 = vmatprep.mubr.bf16.mxu0 0
        %812 = vmatmul.mubr.bf16.gmra.mrb[0].mxu0 %v752
        %v813 = vpop.f32.mrb[0].mxu0
        %v814 = vadd.f32 0.0, %v813
        %v815 = vpop.f32.mrb[0].mxu0
        %v816 = vpop.f32.mrb[0].mxu0
        %v817 = vadd.f32 0.0, %v816
        %v818 = vpop.f32.mrb[0].mxu0
        %819 = vmatprep.mubr.bf16.mxu0 0
        %820 = vmatmul.mubr.bf16.gmra.mrb[0].mxu0 %v755
        %v821 = vpop.f32.mrb[0].mxu0
        %v822 = vadd.f32 0.0, %v821
        %v823 = vpop.f32.mrb[0].mxu0
        %v824 = vpop.f32.mrb[0].mxu0
        %v825 = vadd.f32 0.0, %v824
        %v826 = vpop.f32.mrb[0].mxu0
        %827 = vmatprep.mubr.bf16.mxu0 0
        %828 = vmatmul.mubr.bf16.gmra.mrb[0].mxu0 %v758
        %v829 = vpop.f32.mrb[0].mxu0
        %v830 = vadd.f32 0.0, %v829
        %v831 = vpop.f32.mrb[0].mxu0
        %v832 = vpop.f32.mrb[0].mxu0
        %v833 = vadd.f32 0.0, %v832
        %v834 = vpop.f32.mrb[0].mxu0
        %835 = vmatprep.mubr.bf16.mxu0 0
        %836 = vmatmul.mubr.bf16.gmra.mrb[0].mxu0 %v761
        %v837 = vpop.f32.mrb[0].mxu0
        %v838 = vadd.f32 0.0, %v837
        %v839 = vpop.f32.mrb[0].mxu0
        %v840 = vpop.f32.mrb[0].mxu0
        %v841 = vadd.f32 0.0, %v840
        %v842 = vpop.f32.mrb[0].mxu0
        %843 = vdwg.mxu0
        %v844 = vadd.f32 %v678, %v798
        %v845 = vadd.f32 %v679, %v801
        %v846 = vadd.f32 %v680, %v806
        %v847 = vadd.f32 %v681, %v809
        %v848 = vadd.f32 %v682, %v814
        %v849 = vadd.f32 %v683, %v817
        %v850 = vadd.f32 %v684, %v822
        %v851 = vadd.f32 %v685, %v825
        %v852 = vadd.f32 %v686, %v830
        %v853 = vadd.f32 %v687, %v833
        %v854 = vadd.f32 %v688, %v838
        %v855 = vadd.f32 %v689, %v841
        %s856 = sadd.s32 2, %s691
        %s857 = smul.addr %s856, 4
        %s858 = scalar_lea.vmem %s191, %s857 [#allocation2]
        %v859 = vld [vmem:[%s858] sm:$0xf]
        %v860 = vld [vmem:[%s858 + $0x4] sm:$0xf]
        %v861 = vld [vmem:[%s858 + $0x8] sm:$0xf]
        %v862 = vld [vmem:[%s858 + $0xc] sm:$0xf]
        %v863 = vld [vmem:[%s858 + $0x10] sm:$0xf]
        %v864 = vld [vmem:[%s858 + $0x14] sm:$0xf]
        %v865 = vld [vmem:[%s858 + $0x18] sm:$0xf]
        %v866 = vld [vmem:[%s858 + $0x1c] sm:$0xf]
        %v867 = vld [vmem:[%s858 + $0x20] sm:$0xf]
        %v868 = vld [vmem:[%s858 + $0x24] sm:$0xf]
        %v869 = vld [vmem:[%s858 + $0x28] sm:$0xf]
        %v870 = vld [vmem:[%s858 + $0x2c] sm:$0xf]
        %s871 = scalar_lea.vmem [#allocation5], 32
        %v872 = vld [vmem:[%s871] sm:$0xf]
        %v873 = vld [vmem:[%s871 + $0x4] sm:$0xf]
        %v886 = vunpack.c.l.b16 %v859
        %v887 = vunpack.c.l.b16 %v860
        %v888 = vunpack.c.l.b16 %v861
        %v889 = vunpack.c.l.b16 %v862
        %v890 = vunpack.c.l.b16 %v863
        %v891 = vunpack.c.l.b16 %v864
        %v892 = vunpack.c.l.b16 %v865
        %v893 = vunpack.c.l.b16 %v866
        %v894 = vunpack.c.l.b16 %v867
        %v895 = vunpack.c.l.b16 %v868
        %v896 = vunpack.c.l.b16 %v869
        %v897 = vunpack.c.l.b16 %v870
        %v898 = vpack.c.b16 %v887, %v886
        %v899 = vpack.c.b16 %v889, %v888
        %v900 = vpack.c.b16 %v891, %v890
        %v901 = vpack.c.b16 %v893, %v892
        %v902 = vpack.c.b16 %v895, %v894
        %v903 = vpack.c.b16 %v897, %v896
        %v906 = vunpack.c.l.b16 %v872
        %v907 = vunpack.c.l.b16 %v873
        %v908 = vpack.c.b16 %v907, %v906
        %v911 = vsel %vm290, %v898, 0
        %v914 = vsel %vm290, %v899, 0
        %v917 = vsel %vm290, %v900, 0
        %v920 = vsel %vm290, %v901, 0
        %v923 = vsel %vm290, %v902, 0
        %v926 = vsel %vm290, %v903, 0
        %928 = vmatprep.subr.bf16.mxu0 0
        %929 = vmatpush1.bf16.msra.mxu0 %v908
        %930 = vmatprep.subr.bf16.mxu0 0
        %931 = vmatpush1.bf16.msra.mxu0 0
        %932 = vmatprep.subr.bf16.mxu0 0
        %933 = vmatpush1.bf16.msra.mxu0 0
        %934 = vmatprep.subr.bf16.mxu0 0
        %935 = vmatpush1.bf16.msra.mxu0 0
        %936 = vmatprep.subr.bf16.mxu0 0
        %937 = vmatpush1.bf16.msra.mxu0 0
        %938 = vmatprep.subr.bf16.mxu0 0
        %939 = vmatpush1.bf16.msra.mxu0 0
        %940 = vmatprep.subr.bf16.mxu0 0
        %941 = vmatpush1.bf16.msra.mxu0 0
        %942 = vmatprep.subr.bf16.mxu0 0
        %943 = vmatpush1.bf16.msra.mxu0 0
        %944 = vmatprep.subr.bf16.mxu0 0
        %945 = vmatpush1.bf16.msra.mxu0 0
        %946 = vmatprep.subr.bf16.mxu0 0
        %947 = vmatpush1.bf16.msra.mxu0 0
        %948 = vmatprep.subr.bf16.mxu0 0
        %949 = vmatpush1.bf16.msra.mxu0 0
        %950 = vmatprep.subr.bf16.mxu0 0
        %951 = vmatpush1.bf16.msra.mxu0 0
        %952 = vmatprep.subr.bf16.mxu0 0
        %953 = vmatpush1.bf16.msra.mxu0 0
        %954 = vmatprep.subr.bf16.mxu0 0
        %955 = vmatpush1.bf16.msra.mxu0 0
        %956 = vmatprep.subr.bf16.mxu0 0
        %957 = vmatpush1.bf16.msra.mxu0 0
        %958 = vmatprep.subr.bf16.mxu0 0
        %959 = vmatpush1.bf16.msra.mxu0 0
        %960 = vmatprep.mubr.bf16.mxu0 0
        %961 = vmatmul.mubr.bf16.gmra.mrb[0].mxu0 %v911
        %v962 = vpop.f32.mrb[0].mxu0
        %v963 = vadd.f32 0.0, %v962
        %v964 = vpop.f32.mrb[0].mxu0
        %v965 = vpop.f32.mrb[0].mxu0
        %v966 = vadd.f32 0.0, %v965
        %v967 = vpop.f32.mrb[0].mxu0
        %968 = vmatprep.mubr.bf16.mxu0 0
        %969 = vmatmul.mubr.bf16.gmra.mrb[0].mxu0 %v914
        %v970 = vpop.f32.mrb[0].mxu0
        %v971 = vadd.f32 0.0, %v970
        %v972 = vpop.f32.mrb[0].mxu0
        %v973 = vpop.f32.mrb[0].mxu0
        %v974 = vadd.f32 0.0, %v973
        %v975 = vpop.f32.mrb[0].mxu0
        %976 = vmatprep.mubr.bf16.mxu0 0
        %977 = vmatmul.mubr.bf16.gmra.mrb[0].mxu0 %v917
        %v978 = vpop.f32.mrb[0].mxu0
        %v979 = vadd.f32 0.0, %v978
        %v980 = vpop.f32.mrb[0].mxu0
        %v981 = vpop.f32.mrb[0].mxu0
        %v982 = vadd.f32 0.0, %v981
        %v983 = vpop.f32.mrb[0].mxu0
        %984 = vmatprep.mubr.bf16.mxu0 0
        %985 = vmatmul.mubr.bf16.gmra.mrb[0].mxu0 %v920
        %v986 = vpop.f32.mrb[0].mxu0
        %v987 = vadd.f32 0.0, %v986
        %v988 = vpop.f32.mrb[0].mxu0
        %v989 = vpop.f32.mrb[0].mxu0
        %v990 = vadd.f32 0.0, %v989
        %v991 = vpop.f32.mrb[0].mxu0
        %992 = vmatprep.mubr.bf16.mxu0 0
        %993 = vmatmul.mubr.bf16.gmra.mrb[0].mxu0 %v923
        %v994 = vpop.f32.mrb[0].mxu0
        %v995 = vadd.f32 0.0, %v994
        %v996 = vpop.f32.mrb[0].mxu0
        %v997 = vpop.f32.mrb[0].mxu0
        %v998 = vadd.f32 0.0, %v997
        %v999 = vpop.f32.mrb[0].mxu0
        %1000 = vmatprep.mubr.bf16.mxu0 0
        %1001 = vmatmul.mubr.bf16.gmra.mrb[0].mxu0 %v926
        %v1002 = vpop.f32.mrb[0].mxu0
        %v1003 = vadd.f32 0.0, %v1002
        %v1004 = vpop.f32.mrb[0].mxu0
        %v1005 = vpop.f32.mrb[0].mxu0
        %v1006 = vadd.f32 0.0, %v1005
        %v1007 = vpop.f32.mrb[0].mxu0
        %1008 = vdwg.mxu0
        %v1009 = vadd.f32 %v844, %v963
        %v1010 = vadd.f32 %v845, %v966
        %v1011 = vadd.f32 %v846, %v971
        %v1012 = vadd.f32 %v847, %v974
        %v1013 = vadd.f32 %v848, %v979
        %v1014 = vadd.f32 %v849, %v982
        %v1015 = vadd.f32 %v850, %v987
        %v1016 = vadd.f32 %v851, %v990
        %v1017 = vadd.f32 %v852, %v995
        %v1018 = vadd.f32 %v853, %v998
        %v1019 = vadd.f32 %v854, %v1003
        %v1020 = vadd.f32 %v855, %v1006
        %s1021 = sadd.s32 4, %s691
        %s1022 = smul.addr %s1021, 4
        %s1023 = scalar_lea.vmem %s191, %s1022 [#allocation2]
        %v1024 = vld [vmem:[%s1023] sm:$0xf]
        %v1025 = vld [vmem:[%s1023 + $0x4] sm:$0xf]
        %v1026 = vld [vmem:[%s1023 + $0x8] sm:$0xf]
        %v1027 = vld [vmem:[%s1023 + $0xc] sm:$0xf]
        %v1028 = vld [vmem:[%s1023 + $0x10] sm:$0xf]
        %v1029 = vld [vmem:[%s1023 + $0x14] sm:$0xf]
        %v1030 = vld [vmem:[%s1023 + $0x18] sm:$0xf]
        %v1031 = vld [vmem:[%s1023 + $0x1c] sm:$0xf]
        %v1032 = vld [vmem:[%s1023 + $0x20] sm:$0xf]
        %v1033 = vld [vmem:[%s1023 + $0x24] sm:$0xf]
        %v1034 = vld [vmem:[%s1023 + $0x28] sm:$0xf]
        %v1035 = vld [vmem:[%s1023 + $0x2c] sm:$0xf]
        %s1036 = scalar_lea.vmem [#allocation5], 40
        %v1037 = vld [vmem:[%s1036] sm:$0xf]
        %v1038 = vld [vmem:[%s1036 + $0x4] sm:$0xf]
        %v1051 = vunpack.c.l.b16 %v1024
        %v1052 = vunpack.c.l.b16 %v1025
        %v1053 = vunpack.c.l.b16 %v1026
        %v1054 = vunpack.c.l.b16 %v1027
        %v1055 = vunpack.c.l.b16 %v1028
        %v1056 = vunpack.c.l.b16 %v1029
        %v1057 = vunpack.c.l.b16 %v1030
        %v1058 = vunpack.c.l.b16 %v1031
        %v1059 = vunpack.c.l.b16 %v1032
        %v1060 = vunpack.c.l.b16 %v1033
        %v1061 = vunpack.c.l.b16 %v1034
        %v1062 = vunpack.c.l.b16 %v1035
        %v1063 = vpack.c.b16 %v1052, %v1051
        %v1064 = vpack.c.b16 %v1054, %v1053
        %v1065 = vpack.c.b16 %v1056, %v1055
        %v1066 = vpack.c.b16 %v1058, %v1057
        %v1067 = vpack.c.b16 %v1060, %v1059
        %v1068 = vpack.c.b16 %v1062, %v1061
        %v1071 = vunpack.c.l.b16 %v1037
        %v1072 = vunpack.c.l.b16 %v1038
        %v1073 = vpack.c.b16 %v1072, %v1071
        %v1076 = vsel %vm290, %v1063, 0
        %v1079 = vsel %vm290, %v1064, 0
        %v1082 = vsel %vm290, %v1065, 0
        %v1085 = vsel %vm290, %v1066, 0
        %v1088 = vsel %vm290, %v1067, 0
        %v1091 = vsel %vm290, %v1068, 0
        %1093 = vmatprep.subr.bf16.mxu0 0
        %1094 = vmatpush1.bf16.msra.mxu0 %v1073
        %1095 = vmatprep.subr.bf16.mxu0 0
        %1096 = vmatpush1.bf16.msra.mxu0 0
        %1097 = vmatprep.subr.bf16.mxu0 0
        %1098 = vmatpush1.bf16.msra.mxu0 0
        %1099 = vmatprep.subr.bf16.mxu0 0
        %1100 = vmatpush1.bf16.msra.mxu0 0
        %1101 = vmatprep.subr.bf16.mxu0 0
        %1102 = vmatpush1.bf16.msra.mxu0 0
        %1103 = vmatprep.subr.bf16.mxu0 0
        %1104 = vmatpush1.bf16.msra.mxu0 0
        %1105 = vmatprep.subr.bf16.mxu0 0
        %1106 = vmatpush1.bf16.msra.mxu0 0
        %1107 = vmatprep.subr.bf16.mxu0 0
        %1108 = vmatpush1.bf16.msra.mxu0 0
        %1109 = vmatprep.subr.bf16.mxu0 0
        %1110 = vmatpush1.bf16.msra.mxu0 0
        %1111 = vmatprep.subr.bf16.mxu0 0
        %1112 = vmatpush1.bf16.msra.mxu0 0
        %1113 = vmatprep.subr.bf16.mxu0 0
        %1114 = vmatpush1.bf16.msra.mxu0 0
        %1115 = vmatprep.subr.bf16.mxu0 0
        %1116 = vmatpush1.bf16.msra.mxu0 0
        %1117 = vmatprep.subr.bf16.mxu0 0
        %1118 = vmatpush1.bf16.msra.mxu0 0
        %1119 = vmatprep.subr.bf16.mxu0 0
        %1120 = vmatpush1.bf16.msra.mxu0 0
        %1121 = vmatprep.subr.bf16.mxu0 0
        %1122 = vmatpush1.bf16.msra.mxu0 0
        %1123 = vmatprep.subr.bf16.mxu0 0
        %1124 = vmatpush1.bf16.msra.mxu0 0
        %1125 = vmatprep.mubr.bf16.mxu0 0
        %1126 = vmatmul.mubr.bf16.gmra.mrb[0].mxu0 %v1076
        %v1127 = vpop.f32.mrb[0].mxu0
        %v1128 = vadd.f32 0.0, %v1127
        %v1129 = vpop.f32.mrb[0].mxu0
        %v1130 = vpop.f32.mrb[0].mxu0
        %v1131 = vadd.f32 0.0, %v1130
        %v1132 = vpop.f32.mrb[0].mxu0
        %1133 = vmatprep.mubr.bf16.mxu0 0
        %1134 = vmatmul.mubr.bf16.gmra.mrb[0].mxu0 %v1079
        %v1135 = vpop.f32.mrb[0].mxu0
        %v1136 = vadd.f32 0.0, %v1135
        %v1137 = vpop.f32.mrb[0].mxu0
        %v1138 = vpop.f32.mrb[0].mxu0
        %v1139 = vadd.f32 0.0, %v1138
        %v1140 = vpop.f32.mrb[0].mxu0
        %1141 = vmatprep.mubr.bf16.mxu0 0
        %1142 = vmatmul.mubr.bf16.gmra.mrb[0].mxu0 %v1082
        %v1143 = vpop.f32.mrb[0].mxu0
        %v1144 = vadd.f32 0.0, %v1143
        %v1145 = vpop.f32.mrb[0].mxu0
        %v1146 = vpop.f32.mrb[0].mxu0
        %v1147 = vadd.f32 0.0, %v1146
        %v1148 = vpop.f32.mrb[0].mxu0
        %1149 = vmatprep.mubr.bf16.mxu0 0
        %1150 = vmatmul.mubr.bf16.gmra.mrb[0].mxu0 %v1085
        %v1151 = vpop.f32.mrb[0].mxu0
        %v1152 = vadd.f32 0.0, %v1151
        %v1153 = vpop.f32.mrb[0].mxu0
        %v1154 = vpop.f32.mrb[0].mxu0
        %v1155 = vadd.f32 0.0, %v1154
        %v1156 = vpop.f32.mrb[0].mxu0
        %1157 = vmatprep.mubr.bf16.mxu0 0
        %1158 = vmatmul.mubr.bf16.gmra.mrb[0].mxu0 %v1088
        %v1159 = vpop.f32.mrb[0].mxu0
        %v1160 = vadd.f32 0.0, %v1159
        %v1161 = vpop.f32.mrb[0].mxu0
        %v1162 = vpop.f32.mrb[0].mxu0
        %v1163 = vadd.f32 0.0, %v1162
        %v1164 = vpop.f32.mrb[0].mxu0
        %1165 = vmatprep.mubr.bf16.mxu0 0
        %1166 = vmatmul.mubr.bf16.gmra.mrb[0].mxu0 %v1091
        %v1167 = vpop.f32.mrb[0].mxu0
        %v1168 = vadd.f32 0.0, %v1167
        %v1169 = vpop.f32.mrb[0].mxu0
        %v1170 = vpop.f32.mrb[0].mxu0
        %v1171 = vadd.f32 0.0, %v1170
        %v1172 = vpop.f32.mrb[0].mxu0
        %1173 = vdwg.mxu0
        %v1174 = vadd.f32 %v1009, %v1128
        %v1175 = vadd.f32 %v1010, %v1131
        %v1176 = vadd.f32 %v1011, %v1136
        %v1177 = vadd.f32 %v1012, %v1139
        %v1178 = vadd.f32 %v1013, %v1144
        %v1179 = vadd.f32 %v1014, %v1147
        %v1180 = vadd.f32 %v1015, %v1152
        %v1181 = vadd.f32 %v1016, %v1155
        %v1182 = vadd.f32 %v1017, %v1160
        %v1183 = vadd.f32 %v1018, %v1163
        %v1184 = vadd.f32 %v1019, %v1168
        %v1185 = vadd.f32 %v1020, %v1171
        %s1186 = sadd.s32 %s26, 2
        %s1187 = smul.u32 %s1186, 16
        %s1188 = smul.addr %s1187, 4
        %s1189 = scalar_lea.vmem %s191, %s1188 [#allocation2]
        %v1190 = vld [vmem:[%s1189] sm:$0xf]
        %v1191 = vld [vmem:[%s1189 + $0x4] sm:$0xf]
        %v1192 = vld [vmem:[%s1189 + $0x8] sm:$0xf]
        %v1193 = vld [vmem:[%s1189 + $0xc] sm:$0xf]
        %v1194 = vld [vmem:[%s1189 + $0x10] sm:$0xf]
        %v1195 = vld [vmem:[%s1189 + $0x14] sm:$0xf]
        %v1196 = vld [vmem:[%s1189 + $0x18] sm:$0xf]
        %v1197 = vld [vmem:[%s1189 + $0x1c] sm:$0xf]
        %v1198 = vld [vmem:[%s1189 + $0x20] sm:$0xf]
        %v1199 = vld [vmem:[%s1189 + $0x24] sm:$0xf]
        %v1200 = vld [vmem:[%s1189 + $0x28] sm:$0xf]
        %v1201 = vld [vmem:[%s1189 + $0x2c] sm:$0xf]
        %s1202 = scalar_lea.vmem [#allocation5], 48
        %v1203 = vld [vmem:[%s1202] sm:$0xf]
        %v1204 = vld [vmem:[%s1202 + $0x4] sm:$0xf]
        %v1217 = vunpack.c.l.b16 %v1190
        %v1218 = vunpack.c.l.b16 %v1191
        %v1219 = vunpack.c.l.b16 %v1192
        %v1220 = vunpack.c.l.b16 %v1193
        %v1221 = vunpack.c.l.b16 %v1194
        %v1222 = vunpack.c.l.b16 %v1195
        %v1223 = vunpack.c.l.b16 %v1196
        %v1224 = vunpack.c.l.b16 %v1197
        %v1225 = vunpack.c.l.b16 %v1198
        %v1226 = vunpack.c.l.b16 %v1199
        %v1227 = vunpack.c.l.b16 %v1200
        %v1228 = vunpack.c.l.b16 %v1201
        %v1229 = vpack.c.b16 %v1218, %v1217
        %v1230 = vpack.c.b16 %v1220, %v1219
        %v1231 = vpack.c.b16 %v1222, %v1221
        %v1232 = vpack.c.b16 %v1224, %v1223
        %v1233 = vpack.c.b16 %v1226, %v1225
        %v1234 = vpack.c.b16 %v1228, %v1227
        %v1237 = vunpack.c.l.b16 %v1203
        %v1238 = vunpack.c.l.b16 %v1204
        %v1239 = vpack.c.b16 %v1238, %v1237
        %v1242 = vsel %vm290, %v1229, 0
        %v1245 = vsel %vm290, %v1230, 0
        %v1248 = vsel %vm290, %v1231, 0
        %v1251 = vsel %vm290, %v1232, 0
        %v1254 = vsel %vm290, %v1233, 0
        %v1257 = vsel %vm290, %v1234, 0
        %1259 = vmatprep.subr.bf16.mxu0 0
        %1260 = vmatpush1.bf16.msra.mxu0 %v1239
        %1261 = vmatprep.subr.bf16.mxu0 0
        %1262 = vmatpush1.bf16.msra.mxu0 0
        %1263 = vmatprep.subr.bf16.mxu0 0
        %1264 = vmatpush1.bf16.msra.mxu0 0
        %1265 = vmatprep.subr.bf16.mxu0 0
        %1266 = vmatpush1.bf16.msra.mxu0 0
        %1267 = vmatprep.subr.bf16.mxu0 0
        %1268 = vmatpush1.bf16.msra.mxu0 0
        %1269 = vmatprep.subr.bf16.mxu0 0
        %1270 = vmatpush1.bf16.msra.mxu0 0
        %1271 = vmatprep.subr.bf16.mxu0 0
        %1272 = vmatpush1.bf16.msra.mxu0 0
        %1273 = vmatprep.subr.bf16.mxu0 0
        %1274 = vmatpush1.bf16.msra.mxu0 0
        %1275 = vmatprep.subr.bf16.mxu0 0
        %1276 = vmatpush1.bf16.msra.mxu0 0
        %1277 = vmatprep.subr.bf16.mxu0 0
        %1278 = vmatpush1.bf16.msra.mxu0 0
        %1279 = vmatprep.subr.bf16.mxu0 0
        %1280 = vmatpush1.bf16.msra.mxu0 0
        %1281 = vmatprep.subr.bf16.mxu0 0
        %1282 = vmatpush1.bf16.msra.mxu0 0
        %1283 = vmatprep.subr.bf16.mxu0 0
        %1284 = vmatpush1.bf16.msra.mxu0 0
        %1285 = vmatprep.subr.bf16.mxu0 0
        %1286 = vmatpush1.bf16.msra.mxu0 0
        %1287 = vmatprep.subr.bf16.mxu0 0
        %1288 = vmatpush1.bf16.msra.mxu0 0
        %1289 = vmatprep.subr.bf16.mxu0 0
        %1290 = vmatpush1.bf16.msra.mxu0 0
        %1291 = vmatprep.mubr.bf16.mxu0 0
        %1292 = vmatmul.mubr.bf16.gmra.mrb[0].mxu0 %v1242
        %v1293 = vpop.f32.mrb[0].mxu0
        %v1294 = vadd.f32 0.0, %v1293
        %v1295 = vpop.f32.mrb[0].mxu0
        %v1296 = vpop.f32.mrb[0].mxu0
        %v1297 = vadd.f32 0.0, %v1296
        %v1298 = vpop.f32.mrb[0].mxu0
        %1299 = vmatprep.mubr.bf16.mxu0 0
        %1300 = vmatmul.mubr.bf16.gmra.mrb[0].mxu0 %v1245
        %v1301 = vpop.f32.mrb[0].mxu0
        %v1302 = vadd.f32 0.0, %v1301
        %v1303 = vpop.f32.mrb[0].mxu0
        %v1304 = vpop.f32.mrb[0].mxu0
        %v1305 = vadd.f32 0.0, %v1304
        %v1306 = vpop.f32.mrb[0].mxu0
        %1307 = vmatprep.mubr.bf16.mxu0 0
        %1308 = vmatmul.mubr.bf16.gmra.mrb[0].mxu0 %v1248
        %v1309 = vpop.f32.mrb[0].mxu0
        %v1310 = vadd.f32 0.0, %v1309
        %v1311 = vpop.f32.mrb[0].mxu0
        %v1312 = vpop.f32.mrb[0].mxu0
        %v1313 = vadd.f32 0.0, %v1312
        %v1314 = vpop.f32.mrb[0].mxu0
        %1315 = vmatprep.mubr.bf16.mxu0 0
        %1316 = vmatmul.mubr.bf16.gmra.mrb[0].mxu0 %v1251
        %v1317 = vpop.f32.mrb[0].mxu0
        %v1318 = vadd.f32 0.0, %v1317
        %v1319 = vpop.f32.mrb[0].mxu0
        %v1320 = vpop.f32.mrb[0].mxu0
        %v1321 = vadd.f32 0.0, %v1320
        %v1322 = vpop.f32.mrb[0].mxu0
        %1323 = vmatprep.mubr.bf16.mxu0 0
        %1324 = vmatmul.mubr.bf16.gmra.mrb[0].mxu0 %v1254
        %v1325 = vpop.f32.mrb[0].mxu0
        %v1326 = vadd.f32 0.0, %v1325
        %v1327 = vpop.f32.mrb[0].mxu0
        %v1328 = vpop.f32.mrb[0].mxu0
        %v1329 = vadd.f32 0.0, %v1328
        %v1330 = vpop.f32.mrb[0].mxu0
        %1331 = vmatprep.mubr.bf16.mxu0 0
        %1332 = vmatmul.mubr.bf16.gmra.mrb[0].mxu0 %v1257
        %v1333 = vpop.f32.mrb[0].mxu0
        %v1334 = vadd.f32 0.0, %v1333
        %v1335 = vpop.f32.mrb[0].mxu0
        %v1336 = vpop.f32.mrb[0].mxu0
        %v1337 = vadd.f32 0.0, %v1336
        %v1338 = vpop.f32.mrb[0].mxu0
        %1339 = vdwg.mxu0
        %v1340 = vadd.f32 %v1174, %v1294
        %v1341 = vadd.f32 %v1175, %v1297
        %v1342 = vadd.f32 %v1176, %v1302
        %v1343 = vadd.f32 %v1177, %v1305
        %v1344 = vadd.f32 %v1178, %v1310
        %v1345 = vadd.f32 %v1179, %v1313
        %v1346 = vadd.f32 %v1180, %v1318
        %v1347 = vadd.f32 %v1181, %v1321
        %v1348 = vadd.f32 %v1182, %v1326
        %v1349 = vadd.f32 %v1183, %v1329
        %v1350 = vadd.f32 %v1184, %v1334
        %v1351 = vadd.f32 %v1185, %v1337
        %s1352 = sadd.s32 2, %s1187
        %s1353 = smul.addr %s1352, 4
        %s1354 = scalar_lea.vmem %s191, %s1353 [#allocation2]
        %v1355 = vld [vmem:[%s1354] sm:$0xf]
        %v1356 = vld [vmem:[%s1354 + $0x4] sm:$0xf]
        %v1357 = vld [vmem:[%s1354 + $0x8] sm:$0xf]
        %v1358 = vld [vmem:[%s1354 + $0xc] sm:$0xf]
        %v1359 = vld [vmem:[%s1354 + $0x10] sm:$0xf]
        %v1360 = vld [vmem:[%s1354 + $0x14] sm:$0xf]
        %v1361 = vld [vmem:[%s1354 + $0x18] sm:$0xf]
        %v1362 = vld [vmem:[%s1354 + $0x1c] sm:$0xf]
        %v1363 = vld [vmem:[%s1354 + $0x20] sm:$0xf]
        %v1364 = vld [vmem:[%s1354 + $0x24] sm:$0xf]
        %v1365 = vld [vmem:[%s1354 + $0x28] sm:$0xf]
        %v1366 = vld [vmem:[%s1354 + $0x2c] sm:$0xf]
        %s1367 = scalar_lea.vmem [#allocation5], 56
        %v1368 = vld [vmem:[%s1367] sm:$0xf]
        %v1369 = vld [vmem:[%s1367 + $0x4] sm:$0xf]
        %v1382 = vunpack.c.l.b16 %v1355
        %v1383 = vunpack.c.l.b16 %v1356
        %v1384 = vunpack.c.l.b16 %v1357
        %v1385 = vunpack.c.l.b16 %v1358
        %v1386 = vunpack.c.l.b16 %v1359
        %v1387 = vunpack.c.l.b16 %v1360
        %v1388 = vunpack.c.l.b16 %v1361
        %v1389 = vunpack.c.l.b16 %v1362
        %v1390 = vunpack.c.l.b16 %v1363
        %v1391 = vunpack.c.l.b16 %v1364
        %v1392 = vunpack.c.l.b16 %v1365
        %v1393 = vunpack.c.l.b16 %v1366
        %v1394 = vpack.c.b16 %v1383, %v1382
        %v1395 = vpack.c.b16 %v1385, %v1384
        %v1396 = vpack.c.b16 %v1387, %v1386
        %v1397 = vpack.c.b16 %v1389, %v1388
        %v1398 = vpack.c.b16 %v1391, %v1390
        %v1399 = vpack.c.b16 %v1393, %v1392
        %v1402 = vunpack.c.l.b16 %v1368
        %v1403 = vunpack.c.l.b16 %v1369
        %v1404 = vpack.c.b16 %v1403, %v1402
        %v1407 = vsel %vm290, %v1394, 0
        %v1410 = vsel %vm290, %v1395, 0
        %v1413 = vsel %vm290, %v1396, 0
        %v1416 = vsel %vm290, %v1397, 0
        %v1419 = vsel %vm290, %v1398, 0
        %v1422 = vsel %vm290, %v1399, 0
        %1424 = vmatprep.subr.bf16.mxu0 0
        %1425 = vmatpush1.bf16.msra.mxu0 %v1404
        %1426 = vmatprep.subr.bf16.mxu0 0
        %1427 = vmatpush1.bf16.msra.mxu0 0
        %1428 = vmatprep.subr.bf16.mxu0 0
        %1429 = vmatpush1.bf16.msra.mxu0 0
        %1430 = vmatprep.subr.bf16.mxu0 0
        %1431 = vmatpush1.bf16.msra.mxu0 0
        %1432 = vmatprep.subr.bf16.mxu0 0
        %1433 = vmatpush1.bf16.msra.mxu0 0
        %1434 = vmatprep.subr.bf16.mxu0 0
        %1435 = vmatpush1.bf16.msra.mxu0 0
        %1436 = vmatprep.subr.bf16.mxu0 0
        %1437 = vmatpush1.bf16.msra.mxu0 0
        %1438 = vmatprep.subr.bf16.mxu0 0
        %1439 = vmatpush1.bf16.msra.mxu0 0
        %1440 = vmatprep.subr.bf16.mxu0 0
        %1441 = vmatpush1.bf16.msra.mxu0 0
        %1442 = vmatprep.subr.bf16.mxu0 0
        %1443 = vmatpush1.bf16.msra.mxu0 0
        %1444 = vmatprep.subr.bf16.mxu0 0
        %1445 = vmatpush1.bf16.msra.mxu0 0
        %1446 = vmatprep.subr.bf16.mxu0 0
        %1447 = vmatpush1.bf16.msra.mxu0 0
        %1448 = vmatprep.subr.bf16.mxu0 0
        %1449 = vmatpush1.bf16.msra.mxu0 0
        %1450 = vmatprep.subr.bf16.mxu0 0
        %1451 = vmatpush1.bf16.msra.mxu0 0
        %1452 = vmatprep.subr.bf16.mxu0 0
        %1453 = vmatpush1.bf16.msra.mxu0 0
        %1454 = vmatprep.subr.bf16.mxu0 0
        %1455 = vmatpush1.bf16.msra.mxu0 0
        %1456 = vmatprep.mubr.bf16.mxu0 0
        %1457 = vmatmul.mubr.bf16.gmra.mrb[0].mxu0 %v1407
        %v1458 = vpop.f32.mrb[0].mxu0
        %v1459 = vadd.f32 0.0, %v1458
        %v1460 = vpop.f32.mrb[0].mxu0
        %v1461 = vpop.f32.mrb[0].mxu0
        %v1462 = vadd.f32 0.0, %v1461
        %v1463 = vpop.f32.mrb[0].mxu0
        %1464 = vmatprep.mubr.bf16.mxu0 0
        %1465 = vmatmul.mubr.bf16.gmra.mrb[0].mxu0 %v1410
        %v1466 = vpop.f32.mrb[0].mxu0
        %v1467 = vadd.f32 0.0, %v1466
        %v1468 = vpop.f32.mrb[0].mxu0
        %v1469 = vpop.f32.mrb[0].mxu0
        %v1470 = vadd.f32 0.0, %v1469
        %v1471 = vpop.f32.mrb[0].mxu0
        %1472 = vmatprep.mubr.bf16.mxu0 0
        %1473 = vmatmul.mubr.bf16.gmra.mrb[0].mxu0 %v1413
        %v1474 = vpop.f32.mrb[0].mxu0
        %v1475 = vadd.f32 0.0, %v1474
        %v1476 = vpop.f32.mrb[0].mxu0
        %v1477 = vpop.f32.mrb[0].mxu0
        %v1478 = vadd.f32 0.0, %v1477
        %v1479 = vpop.f32.mrb[0].mxu0
        %1480 = vmatprep.mubr.bf16.mxu0 0
        %1481 = vmatmul.mubr.bf16.gmra.mrb[0].mxu0 %v1416
        %v1482 = vpop.f32.mrb[0].mxu0
        %v1483 = vadd.f32 0.0, %v1482
        %v1484 = vpop.f32.mrb[0].mxu0
        %v1485 = vpop.f32.mrb[0].mxu0
        %v1486 = vadd.f32 0.0, %v1485
        %v1487 = vpop.f32.mrb[0].mxu0
        %1488 = vmatprep.mubr.bf16.mxu0 0
        %1489 = vmatmul.mubr.bf16.gmra.mrb[0].mxu0 %v1419
        %v1490 = vpop.f32.mrb[0].mxu0
        %v1491 = vadd.f32 0.0, %v1490
        %v1492 = vpop.f32.mrb[0].mxu0
        %v1493 = vpop.f32.mrb[0].mxu0
        %v1494 = vadd.f32 0.0, %v1493
        %v1495 = vpop.f32.mrb[0].mxu0
        %1496 = vmatprep.mubr.bf16.mxu0 0
        %1497 = vmatmul.mubr.bf16.gmra.mrb[0].mxu0 %v1422
        %v1498 = vpop.f32.mrb[0].mxu0
        %v1499 = vadd.f32 0.0, %v1498
        %v1500 = vpop.f32.mrb[0].mxu0
        %v1501 = vpop.f32.mrb[0].mxu0
        %v1502 = vadd.f32 0.0, %v1501
        %v1503 = vpop.f32.mrb[0].mxu0
        %1504 = vdwg.mxu0
        %v1505 = vadd.f32 %v1340, %v1459
        %v1506 = vadd.f32 %v1341, %v1462
        %v1507 = vadd.f32 %v1342, %v1467
        %v1508 = vadd.f32 %v1343, %v1470
        %v1509 = vadd.f32 %v1344, %v1475
        %v1510 = vadd.f32 %v1345, %v1478
        %v1511 = vadd.f32 %v1346, %v1483
        %v1512 = vadd.f32 %v1347, %v1486
        %v1513 = vadd.f32 %v1348, %v1491
        %v1514 = vadd.f32 %v1349, %v1494
        %v1515 = vadd.f32 %v1350, %v1499
        %v1516 = vadd.f32 %v1351, %v1502
        %s1517 = sadd.s32 4, %s1187
        %s1518 = smul.addr %s1517, 4
        %s1519 = scalar_lea.vmem %s191, %s1518 [#allocation2]
        %v1520 = vld [vmem:[%s1519] sm:$0xf]
        %v1521 = vld [vmem:[%s1519 + $0x4] sm:$0xf]
        %v1522 = vld [vmem:[%s1519 + $0x8] sm:$0xf]
        %v1523 = vld [vmem:[%s1519 + $0xc] sm:$0xf]
        %v1524 = vld [vmem:[%s1519 + $0x10] sm:$0xf]
        %v1525 = vld [vmem:[%s1519 + $0x14] sm:$0xf]
        %v1526 = vld [vmem:[%s1519 + $0x18] sm:$0xf]
        %v1527 = vld [vmem:[%s1519 + $0x1c] sm:$0xf]
        %v1528 = vld [vmem:[%s1519 + $0x20] sm:$0xf]
        %v1529 = vld [vmem:[%s1519 + $0x24] sm:$0xf]
        %v1530 = vld [vmem:[%s1519 + $0x28] sm:$0xf]
        %v1531 = vld [vmem:[%s1519 + $0x2c] sm:$0xf]
        %s1532 = scalar_lea.vmem [#allocation5], 64
        %v1533 = vld [vmem:[%s1532] sm:$0xf]
        %v1534 = vld [vmem:[%s1532 + $0x4] sm:$0xf]
        %v1547 = vunpack.c.l.b16 %v1520
        %v1548 = vunpack.c.l.b16 %v1521
        %v1549 = vunpack.c.l.b16 %v1522
        %v1550 = vunpack.c.l.b16 %v1523
        %v1551 = vunpack.c.l.b16 %v1524
        %v1552 = vunpack.c.l.b16 %v1525
        %v1553 = vunpack.c.l.b16 %v1526
        %v1554 = vunpack.c.l.b16 %v1527
        %v1555 = vunpack.c.l.b16 %v1528
        %v1556 = vunpack.c.l.b16 %v1529
        %v1557 = vunpack.c.l.b16 %v1530
        %v1558 = vunpack.c.l.b16 %v1531
        %v1559 = vpack.c.b16 %v1548, %v1547
        %v1560 = vpack.c.b16 %v1550, %v1549
        %v1561 = vpack.c.b16 %v1552, %v1551
        %v1562 = vpack.c.b16 %v1554, %v1553
        %v1563 = vpack.c.b16 %v1556, %v1555
        %v1564 = vpack.c.b16 %v1558, %v1557
        %v1567 = vunpack.c.l.b16 %v1533
        %v1568 = vunpack.c.l.b16 %v1534
        %v1569 = vpack.c.b16 %v1568, %v1567
        %v1572 = vsel %vm290, %v1559, 0
        %v1575 = vsel %vm290, %v1560, 0
        %v1578 = vsel %vm290, %v1561, 0
        %v1581 = vsel %vm290, %v1562, 0
        %v1584 = vsel %vm290, %v1563, 0
        %v1587 = vsel %vm290, %v1564, 0
        %1589 = vmatprep.subr.bf16.mxu0 0
        %1590 = vmatpush1.bf16.msra.mxu0 %v1569
        %1591 = vmatprep.subr.bf16.mxu0 0
        %1592 = vmatpush1.bf16.msra.mxu0 0
        %1593 = vmatprep.subr.bf16.mxu0 0
        %1594 = vmatpush1.bf16.msra.mxu0 0
        %1595 = vmatprep.subr.bf16.mxu0 0
        %1596 = vmatpush1.bf16.msra.mxu0 0
        %1597 = vmatprep.subr.bf16.mxu0 0
        %1598 = vmatpush1.bf16.msra.mxu0 0
        %1599 = vmatprep.subr.bf16.mxu0 0
        %1600 = vmatpush1.bf16.msra.mxu0 0
        %1601 = vmatprep.subr.bf16.mxu0 0
        %1602 = vmatpush1.bf16.msra.mxu0 0
        %1603 = vmatprep.subr.bf16.mxu0 0
        %1604 = vmatpush1.bf16.msra.mxu0 0
        %1605 = vmatprep.subr.bf16.mxu0 0
        %1606 = vmatpush1.bf16.msra.mxu0 0
        %1607 = vmatprep.subr.bf16.mxu0 0
        %1608 = vmatpush1.bf16.msra.mxu0 0
        %1609 = vmatprep.subr.bf16.mxu0 0
        %1610 = vmatpush1.bf16.msra.mxu0 0
        %1611 = vmatprep.subr.bf16.mxu0 0
        %1612 = vmatpush1.bf16.msra.mxu0 0
        %1613 = vmatprep.subr.bf16.mxu0 0
        %1614 = vmatpush1.bf16.msra.mxu0 0
        %1615 = vmatprep.subr.bf16.mxu0 0
        %1616 = vmatpush1.bf16.msra.mxu0 0
        %1617 = vmatprep.subr.bf16.mxu0 0
        %1618 = vmatpush1.bf16.msra.mxu0 0
        %1619 = vmatprep.subr.bf16.mxu0 0
        %1620 = vmatpush1.bf16.msra.mxu0 0
        %1621 = vmatprep.mubr.bf16.mxu0 0
        %1622 = vmatmul.mubr.bf16.gmra.mrb[0].mxu0 %v1572
        %v1623 = vpop.f32.mrb[0].mxu0
        %v1624 = vadd.f32 0.0, %v1623
        %v1625 = vpop.f32.mrb[0].mxu0
        %v1626 = vpop.f32.mrb[0].mxu0
        %v1627 = vadd.f32 0.0, %v1626
        %v1628 = vpop.f32.mrb[0].mxu0
        %1629 = vmatprep.mubr.bf16.mxu0 0
        %1630 = vmatmul.mubr.bf16.gmra.mrb[0].mxu0 %v1575
        %v1631 = vpop.f32.mrb[0].mxu0
        %v1632 = vadd.f32 0.0, %v1631
        %v1633 = vpop.f32.mrb[0].mxu0
        %v1634 = vpop.f32.mrb[0].mxu0
        %v1635 = vadd.f32 0.0, %v1634
        %v1636 = vpop.f32.mrb[0].mxu0
        %1637 = vmatprep.mubr.bf16.mxu0 0
        %1638 = vmatmul.mubr.bf16.gmra.mrb[0].mxu0 %v1578
        %v1639 = vpop.f32.mrb[0].mxu0
        %v1640 = vadd.f32 0.0, %v1639
        %v1641 = vpop.f32.mrb[0].mxu0
        %v1642 = vpop.f32.mrb[0].mxu0
        %v1643 = vadd.f32 0.0, %v1642
        %v1644 = vpop.f32.mrb[0].mxu0
        %1645 = vmatprep.mubr.bf16.mxu0 0
        %1646 = vmatmul.mubr.bf16.gmra.mrb[0].mxu0 %v1581
        %v1647 = vpop.f32.mrb[0].mxu0
        %v1648 = vadd.f32 0.0, %v1647
        %v1649 = vpop.f32.mrb[0].mxu0
        %v1650 = vpop.f32.mrb[0].mxu0
        %v1651 = vadd.f32 0.0, %v1650
        %v1652 = vpop.f32.mrb[0].mxu0
        %1653 = vmatprep.mubr.bf16.mxu0 0
        %1654 = vmatmul.mubr.bf16.gmra.mrb[0].mxu0 %v1584
        %v1655 = vpop.f32.mrb[0].mxu0
        %v1656 = vadd.f32 0.0, %v1655
        %v1657 = vpop.f32.mrb[0].mxu0
        %v1658 = vpop.f32.mrb[0].mxu0
        %v1659 = vadd.f32 0.0, %v1658
        %v1660 = vpop.f32.mrb[0].mxu0
        %1661 = vmatprep.mubr.bf16.mxu0 0
        %1662 = vmatmul.mubr.bf16.gmra.mrb[0].mxu0 %v1587
        %v1663 = vpop.f32.mrb[0].mxu0
        %v1664 = vadd.f32 0.0, %v1663
        %v1665 = vpop.f32.mrb[0].mxu0
        %v1666 = vpop.f32.mrb[0].mxu0
        %v1667 = vadd.f32 0.0, %v1666
        %v1668 = vpop.f32.mrb[0].mxu0
        %1669 = vdwg.mxu0
        %v1670 = vadd.f32 %v1505, %v1624
        %v1671 = vadd.f32 %v1506, %v1627
        %v1672 = vadd.f32 %v1507, %v1632
        %v1673 = vadd.f32 %v1508, %v1635
        %v1674 = vadd.f32 %v1509, %v1640
        %v1675 = vadd.f32 %v1510, %v1643
        %v1676 = vadd.f32 %v1511, %v1648
        %v1677 = vadd.f32 %v1512, %v1651
        %v1678 = vadd.f32 %v1513, %v1656
        %v1679 = vadd.f32 %v1514, %v1659
        %v1680 = vadd.f32 %v1515, %v1664
        %v1681 = vadd.f32 %v1516, %v1667
        %v1682 = vld [vmem:[%s2] sm:$0x1]
        %v1684 = vlaneseq
        %v1685 = vshrl.u32 %v1684, 7
        %v1686 = vsub.s32 0, %v1685
        %v1687 = vrot.slane %v1682, %v1686
        %v1689 = vadd.f32 %v1670, %v1687
        %v1690 = vadd.f32 %v1671, %v1687
        %v1691 = vadd.f32 %v1672, %v1687
        %v1692 = vadd.f32 %v1673, %v1687
        %v1693 = vadd.f32 %v1674, %v1687
        %v1694 = vadd.f32 %v1675, %v1687
        %v1695 = vadd.f32 %v1676, %v1687
        %v1696 = vadd.f32 %v1677, %v1687
        %v1697 = vadd.f32 %v1678, %v1687
        %v1698 = vadd.f32 %v1679, %v1687
        %v1699 = vadd.f32 %v1680, %v1687
        %v1700 = vadd.f32 %v1681, %v1687
        %v1701 = vpack.c.bf16 %v1690, %v1689
        %v1702 = vpack.c.bf16 %v1692, %v1691
        %v1703 = vpack.c.bf16 %v1694, %v1693
        %v1704 = vpack.c.bf16 %v1696, %v1695
        %v1705 = vpack.c.bf16 %v1698, %v1697
        %v1706 = vpack.c.bf16 %v1700, %v1699
        %v1713 = vunpack.c.l.b16 %v1701
        %v1714 = vunpack.c.h.b16 %v1701
        %v1715 = vunpack.c.l.b16 %v1702
        %v1716 = vunpack.c.h.b16 %v1702
        %v1717 = vunpack.c.l.b16 %v1703
        %v1718 = vunpack.c.h.b16 %v1703
        %v1719 = vunpack.c.l.b16 %v1704
        %v1720 = vunpack.c.h.b16 %v1704
        %v1721 = vunpack.c.l.b16 %v1705
        %v1722 = vunpack.c.h.b16 %v1705
        %v1723 = vunpack.c.l.b16 %v1706
        %v1724 = vunpack.c.h.b16 %v1706
        %v1725 = vpack.c.b16 %v1713, %v1713
        %v1726 = vpack.c.b16 %v1714, %v1714
        %v1727 = vpack.c.b16 %v1715, %v1715
        %v1728 = vpack.c.b16 %v1716, %v1716
        %v1729 = vpack.c.b16 %v1717, %v1717
        %v1730 = vpack.c.b16 %v1718, %v1718
        %v1731 = vpack.c.b16 %v1719, %v1719
        %v1732 = vpack.c.b16 %v1720, %v1720
        %v1733 = vpack.c.b16 %v1721, %v1721
        %v1734 = vpack.c.b16 %v1722, %v1722
        %v1735 = vpack.c.b16 %v1723, %v1723
        %v1736 = vpack.c.b16 %v1724, %v1724
        %1749 = vst [vmem:[%s217] sm:$0xf] %v1725
        %1750 = vst [vmem:[%s217 + $0x4] sm:$0xf] %v1726
        %1751 = vst [vmem:[%s217 + $0x8] sm:$0xf] %v1727
        %1752 = vst [vmem:[%s217 + $0xc] sm:$0xf] %v1728
        %1753 = vst [vmem:[%s217 + $0x10] sm:$0xf] %v1729
        %1754 = vst [vmem:[%s217 + $0x14] sm:$0xf] %v1730
        %1755 = vst [vmem:[%s217 + $0x18] sm:$0xf] %v1731
        %1756 = vst [vmem:[%s217 + $0x1c] sm:$0xf] %v1732
        %1757 = vst [vmem:[%s217 + $0x20] sm:$0xf] %v1733
        %1758 = vst [vmem:[%s217 + $0x24] sm:$0xf] %v1734
        %1759 = vst [vmem:[%s217 + $0x28] sm:$0xf] %v1735
        %1760 = vst [vmem:[%s217 + $0x2c] sm:$0xf] %v1736
        %s1761 = sand.u32 %s111, 1
        %s1762 = scalar_lea.sflag [#allocation4], %s1761
        %s1763 = sand.u32 %s111, 1
        %s1764 = smul.addr %s1763, 48
        %s1765 = scalar_lea.vmem [#allocation7], %s1764
        // Predicated region
        $region41: #{tpu_custom_call.1} parent=31 // pred_check
          %p1766 = pneg %p121
        $region42: #{tpu_custom_call.1} parent=31 // pred_check_branch
          %1768 = sbr.rel (%p1766) target = $region44
        $region43: #{tpu_custom_call.1} parent=31 // pred_region
          %s1770 = ssub.s32 768, 768
          %1771 = vsyncadd %s1762, %s1770
          %s1772 = smul.addr %s26, 12
          %s1773 = smul.addr %s25, 96
          %s1774 = sadd.s32 %s1772, %s1773
          %s1775 = smul.addr %s1774, 64
          %s1776 = scalar_lea.hbm %s3, %s1775
          %s1777 = sshll.u32 %s1765, 4
          %s1778 = int_to_ptr.vmem [resolvable:$true] %s1777
          %1783 = dma.vmem_to_hbm [thread:$0]  %s1778, 768, %s1776, %s1762, 64, 64, 4
        $region44: #{tpu_custom_call.1} parent=31 // pred_fallthru
          _
      $region32: #{tpu_custom_call.1} parent=5 // pred_fallthru
        _
      %p1784 = scmp.le.s32.totalorder 2, %s16
      // Predicated region
      $region45: #{tpu_custom_call.1} parent=5 // pred_check
        %p1785 = pneg %p1784
      $region46: #{tpu_custom_call.1} parent=5 // pred_check_branch
        %1787 = sbr.rel (%p1785) target = $region48
      $region47: #{tpu_custom_call.1} parent=5 // pred_region
        %s1788 = ssub.s32 %s16, 2
        // Predicated region
        $region49: #{tpu_custom_call.1} parent=47 // pred_check
          %p1789 = pneg %p127
        $region50: #{tpu_custom_call.1} parent=47 // pred_check_branch
          %1791 = sbr.rel (%p1789) target = $region52
        $region51: #{tpu_custom_call.1} parent=47 // pred_region
          %s1792 = sand.u32 %s112, 1
          %s1793 = scalar_lea.sflag [#allocation4], %s1792
          %s1794 = sand.u32 %s112, 1
          %s1795 = smul.addr %s1794, 48
          %s1796 = scalar_lea.vmem [#allocation7], %s1795
          %1797 = dma.done %s1793, 768
        $region52: #{tpu_custom_call.1} parent=47 // pred_fallthru
          _
      $region48: #{tpu_custom_call.1} parent=5 // pred_fallthru
        _
    $region6: #{tpu_custom_call.1} parent=1 // loop_footer
      %s20 = sadd.s32 1, %s16
    $region7: #{tpu_custom_call.1} parent=1 // loop_footer_branch
      %15 = sbr.rel target = $region3
    $region8: #{tpu_custom_call.1} parent=1 // loop_exit
      _
    %1798 = vsyncpa [#allocation3], 1
    %s1799 = scalar_lea.sflag [#allocation3], 1
    %1800 = vsyncpa %s1799, 1
    %1801 = vsyncpa [#allocation6], 1
    %1802 = vsyncpa [#allocation4], 1
    %s1803 = scalar_lea.sflag [#allocation4], 1
    %1804 = vsyncpa %s1803, 1

</llo_original>
